<compile_context>
chip_gen: v5e
topology: v5e:2x2
jax: 0.10.0
libtpu: 0.0.40
codegen_flags: <defaults>
</compile_context>

<pallas_src>
import functools

import numpy as np
import jax
import jax.numpy as jnp
from jax.experimental import pallas as pl
from jax.experimental.pallas import tpu as pltpu

D_MODEL = 32                 # FPN / neck channel dim (real SAM2 uses 256)
C_TRUNK = (16, 32, 64)       # synthetic trunk channels per level


# ------------------------------ small helpers -------------------------------

def _vmem_limit_bytes():
    """Per-generation scoped-VMEM budget (v5e/v6e: 128 MiB phys, v7x: 64 MiB)."""
    try:
        cap = int(pltpu.get_tpu_info().vmem_capacity_bytes)
    except Exception:
        cap = 64 * 1024 * 1024
    return max(16 * 1024 * 1024, min(cap - 16 * 1024 * 1024, 100 * 1024 * 1024))


def _compiler_params():
    return pltpu.CompilerParams(
        dimension_semantics=("parallel",),          # M-tiles shard across v7x's 2 TCs
        vmem_limit_bytes=_vmem_limit_bytes(),
    )


def _pick_tm(m, row_mult=16, cap=512):
    """Largest tile <= cap that divides m and is a multiple of row_mult,
    preferring >= 2 grid steps (v7x megacore).  Falls back to the full dim
    (always a legal block) when no such divisor exists."""
    best = m
    limit = min(cap, m // 2)
    t = row_mult
    while t <= limit:
        if m % t == 0:
            best = t
        t += row_mult
    return best


def _space_to_depth(x_nhwc, k):
    """(1,H,W,C) -> (H/k*W/k, k*k*C) column matrix for a stride==kernel conv."""
    _, h, w, c = x_nhwc.shape
    col = x_nhwc.reshape(h // k, k, w // k, k, c)
    col = jnp.transpose(col, (0, 2, 1, 3, 4))
    return col.reshape((h // k) * (w // k), k * k * c)


def _upsample_tile_matrix(hc, wc):
    """0/1 matrix U (4*hc*wc, hc*wc): U @ coarse_block == nearest-2x upsample of
    an (hc, wc) coarse row-block into its (2*hc, 2*wc) fine row-block.
    Built with numpy -> compile-time constant, identical for every grid step."""
    wf = 2 * wc
    rows = np.arange(4 * hc * wc)
    src = (rows // wf) // 2 * wc + (rows % wf) // 2
    return jnp.asarray((src[:, None] == np.arange(hc * wc)[None, :]).astype(np.float32))


# ------------------------------ Pallas kernels ------------------------------

def _mm_bias_kernel(x_ref, w_ref, b_ref, o_ref):
    # bf16 (tm,K) @ (K,N) on the MXU with f32 accumulation; bias add on the VPU.
    acc = jnp.dot(x_ref[...], w_ref[...], preferred_element_type=jnp.float32)
    o_ref[...] = (acc + b_ref[...]).astype(o_ref.dtype)


def matmul_bias(x, w, b2d, out_dtype=jnp.bfloat16):
    """x:(M,K) bf16, w:(K,N) bf16, b2d:(1,N) f32 -> (M,N); M tiled on a
    'parallel' grid axis; all widths natural (no channel padding)."""
    M, K = x.shape
    N = w.shape[1]
    tm = _pick_tm(M)
    return pl.pallas_call(
        _mm_bias_kernel,
        out_shape=jax.ShapeDtypeStruct((M, N), out_dtype),
        grid=(M // tm,),
        in_specs=[pl.BlockSpec((tm, K), lambda i: (i, 0)),
                  pl.BlockSpec((K, N), lambda i: (0, 0)),     # constant index -> one DMA
                  pl.BlockSpec((1, N), lambda i: (0, 0))],
        out_specs=pl.BlockSpec((tm, N), lambda i: (i, 0)),
        compiler_params=_compiler_params(),
    )(x, w, b2d)


def _down_top_kernel(col_ref, wd_ref, bd_ref, wl_ref, bl_ref, nme_ref,
                     fpn_ref, feat_ref):
    # downsample conv -> lateral 1x1 conv -> + no_mem_embed, fused in one kernel.
    t = (jnp.dot(col_ref[...], wd_ref[...],
                 preferred_element_type=jnp.float32) + bd_ref[...])
    fpn = (jnp.dot(t.astype(jnp.bfloat16), wl_ref[...],
                   preferred_element_type=jnp.float32) + bl_ref[...])
    fpn_ref[...] = fpn
    feat_ref[...] = fpn + nme_ref[...]


def down_top_level(col, wd, bd2d, wl, bl2d, nme2d):
    M, K = col.shape
    Nd = wd.shape[1]
    N = wl.shape[1]
    tm = _pick_tm(M)
    return pl.pallas_call(
        _down_top_kernel,
        out_shape=(jax.ShapeDtypeStruct((M, N), jnp.float32),
                   jax.ShapeDtypeStruct((M, N), jnp.float32)),
        grid=(M // tm,),
        in_specs=[pl.BlockSpec((tm, K), lambda i: (i, 0)),
                  pl.BlockSpec((K, Nd), lambda i: (0, 0)),
                  pl.BlockSpec((1, Nd), lambda i: (0, 0)),
                  pl.BlockSpec((Nd, N), lambda i: (0, 0)),
                  pl.BlockSpec((1, N), lambda i: (0, 0)),
                  pl.BlockSpec((1, N), lambda i: (0, 0))],
        out_specs=(pl.BlockSpec((tm, N), lambda i: (i, 0)),
                   pl.BlockSpec((tm, N), lambda i: (i, 0))),
        compiler_params=_compiler_params(),
    )(col, wd, bd2d, wl, bl2d, nme2d)


def _fpn_level_kernel(x_ref, wl_ref, bl_ref, u_ref, coarse_ref, ws_ref, bs_ref,
                      *out_refs, emit_fpn):
    # lateral 1x1 conv + nearest-2x upsample-add of the coarser FPN level
    # (per-tile constant 0/1 matrix x the matching coarse row-block, exact)
    # + conv_s{0,1} 1x1 conv epilogue, all fused.
    lat = (jnp.dot(x_ref[...], wl_ref[...],
                   preferred_element_type=jnp.float32) + bl_ref[...])
    up = jnp.dot(u_ref[...], coarse_ref[...], preferred_element_type=jnp.float32)
    fpn = lat + up
    feat = (jnp.dot(fpn.astype(jnp.bfloat16), ws_ref[...],
                    preferred_element_type=jnp.float32) + bs_ref[...])
    if emit_fpn:
        out_refs[0][...] = fpn
        out_refs[1][...] = feat
    else:
        out_refs[0][...] = feat          # level 0: fpn map is unused, never stored


def fpn_level(x, w_fine, wl, bl2d, coarse, ws, bs2d, *, emit_fpn):
    """fpn = x @ wl + bl + nearest2x(coarse) ; feat = fpn @ ws + bs.
    x:(M,K) bf16 fine trunk features, row-major over (Hf, Wf=w_fine).
    coarse:(M//4, N) f32 coarser FPN level, row-major over (Hf//2, Wf//2)."""
    M, K = x.shape
    N = wl.shape[1]
    Ns = ws.shape[1]
    # tm covers whole, even-aligned fine rows (multiple of 2*w_fine) so fine
    # block i maps exactly onto coarse block i of tm//4 rows; also a multiple
    # of 32 so tm//4 is sublane-aligned (8).  Otherwise tm == M (full block).
    row_mult = (2 * w_fine) * 32 // int(np.gcd(2 * w_fine, 32))
    tm = _pick_tm(M, row_mult=row_mult)
    mc = tm // 4
    u = _upsample_tile_matrix(tm // (2 * w_fine), w_fine // 2)   # (tm, mc) const

    if emit_fpn:
        out_shape = (jax.ShapeDtypeStruct((M, N), jnp.float32),
                     jax.ShapeDtypeStruct((M, Ns), jnp.float32))
        out_specs = (pl.BlockSpec((tm, N), lambda i: (i, 0)),
                     pl.BlockSpec((tm, Ns), lambda i: (i, 0)))
    else:
        out_shape = (jax.ShapeDtypeStruct((M, Ns), jnp.float32),)
        out_specs = (pl.BlockSpec((tm, Ns), lambda i: (i, 0)),)

    return pl.pallas_call(
        functools.partial(_fpn_level_kernel, emit_fpn=emit_fpn),
        out_shape=out_shape,
        grid=(M // tm,),
        in_specs=[pl.BlockSpec((tm, K), lambda i: (i, 0)),
                  pl.BlockSpec((K, N), lambda i: (0, 0)),
                  pl.BlockSpec((1, N), lambda i: (0, 0)),
                  pl.BlockSpec((tm, mc), lambda i: (0, 0)),    # per-tile const U
                  pl.BlockSpec((mc, N), lambda i: (i, 0)),     # only matching coarse rows
                  pl.BlockSpec((N, Ns), lambda i: (0, 0)),
                  pl.BlockSpec((1, Ns), lambda i: (0, 0))],
        out_specs=out_specs,
        compiler_params=_compiler_params(),
    )(x, wl, bl2d, u, coarse, ws, bs2d)


# --------------------------- parameters (synthetic) --------------------------

def init_params(key):
    ks = jax.random.split(key, 12)

    def w(k, shape):
        return jax.random.normal(k, shape, jnp.float32) * 0.05

    return {
        # trunk (patch embed + 2 downsample stages)
        "patch_w": w(ks[0], (C_TRUNK[0], 3, 4, 4)),
        "patch_b": jnp.zeros((C_TRUNK[0],), jnp.float32),
        "down1_w": w(ks[1], (C_TRUNK[1], C_TRUNK[0], 2, 2)),
        "down1_b": jnp.zeros((C_TRUNK[1],), jnp.float32),
        "down2_w": w(ks[2], (C_TRUNK[2], C_TRUNK[1], 2, 2)),
        "down2_b": jnp.zeros((C_TRUNK[2],), jnp.float32),
        # FPN neck lateral 1x1 convs -> d_model
        "lat0_w": w(ks[3], (D_MODEL, C_TRUNK[0], 1, 1)), "lat0_b": w(ks[4], (D_MODEL,)),
        "lat1_w": w(ks[5], (D_MODEL, C_TRUNK[1], 1, 1)), "lat1_b": w(ks[6], (D_MODEL,)),
        "lat2_w": w(ks[7], (D_MODEL, C_TRUNK[2], 1, 1)), "lat2_b": w(ks[8], (D_MODEL,)),
        # sam_mask_decoder.conv_s0 / conv_s1 (1x1 convs, d_model -> d_model/8, /4)
        "s0_w": w(ks[9], (D_MODEL // 8, D_MODEL, 1, 1)),
        "s0_b": jnp.zeros((D_MODEL // 8,), jnp.float32),
        "s1_w": w(ks[10], (D_MODEL // 4, D_MODEL, 1, 1)),
        "s1_b": jnp.zeros((D_MODEL // 4,), jnp.float32),
        # no_mem_embed: (1, 1, d_model)
        "no_mem_embed": w(ks[11], (1, 1, D_MODEL)),
    }


def _conv_to_matmul(w, b):
    """PyTorch (Cout,Cin,kh,kw) conv weight -> bf16 (kh*kw*Cin, Cout) matmul
    weight matching NHWC space-to-depth column order, plus f32 (1,Cout) bias.
    No channel padding: blocks use the full (natural) last dim."""
    cout, cin, kh, kw = w.shape
    wm = jnp.transpose(w, (2, 3, 1, 0)).reshape(kh * kw * cin, cout)
    return wm.astype(jnp.bfloat16), b.reshape(1, cout).astype(jnp.float32)


def prepare_params(p):
    """One-time relayout of PyTorch-style conv weights into bf16 matmul form."""
    out = {}
    for name in ("patch", "down1", "down2", "lat0", "lat1", "lat2", "s0", "s1"):
        out[name + "_w"], out[name + "_b"] = _conv_to_matmul(p[name + "_w"],
                                                             p[name + "_b"])
    out["no_mem_embed"] = p["no_mem_embed"].reshape(1, D_MODEL).astype(jnp.float32)
    return out


# ------------------------------ forward pass --------------------------------

def sam2_image_encoder_forward(x, p):
    """x: (1, 3, H, W) NCHW f32 (batch 1, as in the export reference).
    p: prepare_params(...) output. Returns (feats0, feats1, feats2) in NCHW."""
    _, _, H, W = x.shape
    xh = jnp.transpose(x, (0, 2, 3, 1))                        # to NHWC once

    # ---- trunk: 3 feature levels at strides 4 / 8 / 16 (bf16, natural widths) ----
    col0 = _space_to_depth(xh, 4).astype(jnp.bfloat16)         # (M0, 48)
    t0 = matmul_bias(col0, p["patch_w"], p["patch_b"])         # (M0, 16) bf16
    h0, w0 = H // 4, W // 4

    col1 = _space_to_depth(t0.reshape(1, h0, w0, C_TRUNK[0]), 2)   # (M1, 64) bf16
    t1 = matmul_bias(col1, p["down1_w"], p["down1_b"])             # (M1, 32) bf16
    h1, w1 = h0 // 2, w0 // 2

    col2 = _space_to_depth(t1.reshape(1, h1, w1, C_TRUNK[1]), 2)   # (M2, 128) bf16
    h2, w2 = h1 // 2, w1 // 2

    # ---- level 2 (top): down2 + lateral 1x1 + no_mem_embed add, fused ----
    fpn2, feat2 = down_top_level(col2, p["down2_w"], p["down2_b"],
                                 p["lat2_w"], p["lat2_b"], p["no_mem_embed"])

    # ---- level 1: lateral + nearest-2x(fpn2) add + conv_s1, fused ----
    fpn1, feat1 = fpn_level(t1, w1, p["lat1_w"], p["lat1_b"], fpn2,
                            p["s1_w"], p["s1_b"], emit_fpn=True)

    # ---- level 0: lateral + nearest-2x(fpn1) add + conv_s0, fused (fpn0 dropped) ----
    (feat0,) = fpn_level(t0, w0, p["lat0_w"], p["lat0_b"], fpn1,
                         p["s0_w"], p["s0_b"], emit_fpn=False)

    # ---- back to the reference NCHW layout ----
    def to_nchw(f, h, w, c):
        return jnp.transpose(f.reshape(1, h, w, c), (0, 3, 1, 2))

    return (to_nchw(feat0, h0, w0, D_MODEL // 8),
            to_nchw(feat1, h1, w1, D_MODEL // 4),
            to_nchw(feat2, h2, w2, D_MODEL))


# ----------------------- pure-jnp reference (for checking) -------------------

def reference_forward(x, p):
    """Same synthetic model in plain jnp, with the identical bf16 operand
    quantisation, so the tolerance can be tight (1e-4)."""
    b16 = jnp.bfloat16

    def conv(x_nhwc, w, b, k):
        cout, cin, kh, kw = w.shape
        col = _space_to_depth(x_nhwc, k).astype(b16)
        wm = jnp.transpose(w, (2, 3, 1, 0)).reshape(kh * kw * cin, cout).astype(b16)
        y = jnp.dot(col, wm, preferred_element_type=jnp.float32) + b
        h, wd = x_nhwc.shape[1] // k, x_nhwc.shape[2] // k
        return y.reshape(1, h, wd, cout)

    xh = jnp.transpose(x, (0, 2, 3, 1))
    t0 = conv(xh, p["patch_w"], p["patch_b"], 4).astype(b16)
    t1 = conv(t0, p["down1_w"], p["down1_b"], 2).astype(b16)
    t2 = conv(t1, p["down2_w"], p["down2_b"], 2).astype(b16)
    lat0 = conv(t0, p["lat0_w"], p["lat0_b"], 1)
    lat1 = conv(t1, p["lat1_w"], p["lat1_b"], 1)
    lat2 = conv(t2, p["lat2_w"], p["lat2_b"], 1)
    fpn2 = lat2
    fpn1 = lat1 + jnp.repeat(jnp.repeat(fpn2, 2, axis=1), 2, axis=2)
    fpn0 = lat0 + jnp.repeat(jnp.repeat(fpn1, 2, axis=1), 2, axis=2)
    feat0 = conv(fpn0.astype(b16), p["s0_w"], p["s0_b"], 1)
    feat1 = conv(fpn1.astype(b16), p["s1_w"], p["s1_b"], 1)
    feat2 = fpn2 + p["no_mem_embed"].reshape(1, 1, 1, D_MODEL)
    nchw = lambda f: jnp.transpose(f, (0, 3, 1, 2))
    return nchw(feat0), nchw(feat1), nchw(feat2)


# ---------------------------------- main -------------------------------------

if __name__ == "__main__":
    key = jax.random.PRNGKey(0)
    pkey, xkey = jax.random.split(key)
    params = init_params(pkey)
    x = jax.random.normal(xkey, (1, 3, 32, 32), jnp.float32)   # NCHW, batch=1

    prepared = prepare_params(params)          # one-time weight relayout (bf16)
    fwd = jax.jit(sam2_image_encoder_forward)
    f0, f1, f2 = fwd(x, prepared)
    jax.block_until_ready((f0, f1, f2))

    assert f0.shape == (1, D_MODEL // 8, 8, 8), f0.shape   # high-res, conv_s0 out
    assert f1.shape == (1, D_MODEL // 4, 4, 4), f1.shape   # mid-res,  conv_s1 out
    assert f2.shape == (1, D_MODEL, 2, 2), f2.shape        # low-res + no_mem_embed

    # numerical check against a pure-jnp reference with matched bf16 quantisation
    r0, r1, r2 = jax.jit(reference_forward)(x, params)
    jax.block_until_ready((r0, r1, r2))
    for got, ref in ((f0, r0), (f1, r1), (f2, r2)):
        err = float(jnp.max(jnp.abs(got - ref)) / (jnp.max(jnp.abs(ref)) + 1e-6))
        assert err < 1e-4, err

    print("KERNEL_OK")
</pallas_src>

<mosaic_0001>
module attributes {stable_mosaic.version = 11 : i64} {
  func.func @_mm_bias_kernel(%arg0: i32, %arg1: memref<32x48xbf16, #tpu.memory_space<vmem>>, %arg2: memref<48x16xbf16, #tpu.memory_space<vmem>>, %arg3: memref<1x16xf32, #tpu.memory_space<vmem>>, %arg4: memref<32x16xbf16, #tpu.memory_space<vmem>>) attributes {dimension_semantics = [#tpu.dimension_semantics<parallel>], iteration_bounds = array<i64: 2>, scalar_prefetch = 0 : i64, scratch_operands = 0 : i64, tpu.core_type = #tpu.core_type<tc>, window_params = [{transform_indices = @transform_0, window_bounds = array<i64: 32, 48>}, {pipeline_mode = #tpu.pipeline_mode<synchronous>, transform_indices = @transform_1, window_bounds = array<i64: 48, 16>}, {pipeline_mode = #tpu.pipeline_mode<synchronous>, transform_indices = @transform_2, window_bounds = array<i64: 1, 16>}, {transform_indices = @transform_3, window_bounds = array<i64: 32, 16>}]} {
    %c0 = arith.constant 0 : index
    %c0_0 = arith.constant 0 : index
    %0 = vector.load %arg1[%c0, %c0_0] : memref<32x48xbf16, #tpu.memory_space<vmem>>, vector<32x48xbf16>
    %c0_1 = arith.constant 0 : index
    %c0_2 = arith.constant 0 : index
    %1 = vector.load %arg2[%c0_1, %c0_2] : memref<48x16xbf16, #tpu.memory_space<vmem>>, vector<48x16xbf16>
    %cst = arith.constant dense<0.000000e+00> : vector<32x16xf32>
    %2 = tpu.matmul %0, %1, %cst {dimension_numbers = #tpu.dot_dimension_numbers<[1], [0], [0], [1], [0, 0, 1, 1], [], []>} : vector<32x48xbf16>, vector<48x16xbf16>, vector<32x16xf32> -> vector<32x16xf32>
    %c0_3 = arith.constant 0 : index
    %c0_4 = arith.constant 0 : index
    %3 = vector.load %arg3[%c0_3, %c0_4] : memref<1x16xf32, #tpu.memory_space<vmem>>, vector<1x16xf32>
    %4 = vector.broadcast %3 : vector<1x16xf32> to vector<32x16xf32>
    %5 = arith.addf %2, %4 : vector<32x16xf32>
    %6 = arith.truncf %5 : vector<32x16xf32> to vector<32x16xbf16>
    %c0_5 = arith.constant 0 : index
    %c0_6 = arith.constant 0 : index
    %7 = vector.load %arg4[%c0_5, %c0_6] : memref<32x16xbf16, #tpu.memory_space<vmem>>, vector<32x16xbf16>
    tpu.vector_store %arg4[%c0_5, %c0_6], %6 {strides = array<i32>} : memref<32x16xbf16, #tpu.memory_space<vmem>>, vector<32x16xbf16>,
    return
  }
  func.func @transform_0(%arg0: i32) -> (i32, i32) {
    %c0_i32 = arith.constant 0 : i32
    %c0_i32_0 = arith.constant 0 : i32
    return %arg0, %c0_i32 : i32, i32
  }
  func.func @transform_1(%arg0: i32) -> (i32, i32) {
    %c0_i32 = arith.constant 0 : i32
    %c0_i32_0 = arith.constant 0 : i32
    %c0_i32_1 = arith.constant 0 : i32
    return %c0_i32, %c0_i32_0 : i32, i32
  }
  func.func @transform_2(%arg0: i32) -> (i32, i32) {
    %c0_i32 = arith.constant 0 : i32
    %c0_i32_0 = arith.constant 0 : i32
    %c0_i32_1 = arith.constant 0 : i32
    return %c0_i32, %c0_i32_0 : i32, i32
  }
  func.func @transform_3(%arg0: i32) -> (i32, i32) {
    %c0_i32 = arith.constant 0 : i32
    %c0_i32_0 = arith.constant 0 : i32
    return %arg0, %c0_i32 : i32, i32
  }
}

module attributes {stable_mosaic.version = 11 : i64} {
  func.func @_mm_bias_kernel(%arg0: i32, %arg1: memref<16x64xbf16, #tpu.memory_space<vmem>>, %arg2: memref<64x32xbf16, #tpu.memory_space<vmem>>, %arg3: memref<1x32xf32, #tpu.memory_space<vmem>>, %arg4: memref<16x32xbf16, #tpu.memory_space<vmem>>) attributes {dimension_semantics = [#tpu.dimension_semantics<parallel>], iteration_bounds = array<i64: 1>, scalar_prefetch = 0 : i64, scratch_operands = 0 : i64, tpu.core_type = #tpu.core_type<tc>, window_params = [{transform_indices = @transform_0, window_bounds = array<i64: 16, 64>}, {pipeline_mode = #tpu.pipeline_mode<synchronous>, transform_indices = @transform_1, window_bounds = array<i64: 64, 32>}, {pipeline_mode = #tpu.pipeline_mode<synchronous>, transform_indices = @transform_2, window_bounds = array<i64: 1, 32>}, {transform_indices = @transform_3, window_bounds = array<i64: 16, 32>}]} {
    %c0 = arith.constant 0 : index
    %c0_0 = arith.constant 0 : index
    %0 = vector.load %arg1[%c0, %c0_0] : memref<16x64xbf16, #tpu.memory_space<vmem>>, vector<16x64xbf16>
    %c0_1 = arith.constant 0 : index
    %c0_2 = arith.constant 0 : index
    %1 = vector.load %arg2[%c0_1, %c0_2] : memref<64x32xbf16, #tpu.memory_space<vmem>>, vector<64x32xbf16>
    %cst = arith.constant dense<0.000000e+00> : vector<16x32xf32>
    %2 = tpu.matmul %0, %1, %cst {dimension_numbers = #tpu.dot_dimension_numbers<[1], [0], [0], [1], [0, 0, 1, 1], [], []>} : vector<16x64xbf16>, vector<64x32xbf16>, vector<16x32xf32> -> vector<16x32xf32>
    %c0_3 = arith.constant 0 : index
    %c0_4 = arith.constant 0 : index
    %3 = vector.load %arg3[%c0_3, %c0_4] : memref<1x32xf32, #tpu.memory_space<vmem>>, vector<1x32xf32>
    %4 = vector.broadcast %3 : vector<1x32xf32> to vector<16x32xf32>
    %5 = arith.addf %2, %4 : vector<16x32xf32>
    %6 = arith.truncf %5 : vector<16x32xf32> to vector<16x32xbf16>
    %c0_5 = arith.constant 0 : index
    %c0_6 = arith.constant 0 : index
    %7 = vector.load %arg4[%c0_5, %c0_6] : memref<16x32xbf16, #tpu.memory_space<vmem>>, vector<16x32xbf16>
    tpu.vector_store %arg4[%c0_5, %c0_6], %6 {strides = array<i32>} : memref<16x32xbf16, #tpu.memory_space<vmem>>, vector<16x32xbf16>,
    return
  }
  func.func @transform_0(%arg0: i32) -> (i32, i32) {
    %c0_i32 = arith.constant 0 : i32
    %c0_i32_0 = arith.constant 0 : i32
    return %arg0, %c0_i32 : i32, i32
  }
  func.func @transform_1(%arg0: i32) -> (i32, i32) {
    %c0_i32 = arith.constant 0 : i32
    %c0_i32_0 = arith.constant 0 : i32
    %c0_i32_1 = arith.constant 0 : i32
    return %c0_i32, %c0_i32_0 : i32, i32
  }
  func.func @transform_2(%arg0: i32) -> (i32, i32) {
    %c0_i32 = arith.constant 0 : i32
    %c0_i32_0 = arith.constant 0 : i32
    %c0_i32_1 = arith.constant 0 : i32
    return %c0_i32, %c0_i32_0 : i32, i32
  }
  func.func @transform_3(%arg0: i32) -> (i32, i32) {
    %c0_i32 = arith.constant 0 : i32
    %c0_i32_0 = arith.constant 0 : i32
    return %arg0, %c0_i32 : i32, i32
  }
}

module attributes {stable_mosaic.version = 11 : i64} {
  func.func @_down_top_kernel(%arg0: i32, %arg1: memref<4x128xbf16, #tpu.memory_space<vmem>>, %arg2: memref<128x64xbf16, #tpu.memory_space<vmem>>, %arg3: memref<1x64xf32, #tpu.memory_space<vmem>>, %arg4: memref<64x32xbf16, #tpu.memory_space<vmem>>, %arg5: memref<1x32xf32, #tpu.memory_space<vmem>>, %arg6: memref<1x32xf32, #tpu.memory_space<vmem>>, %arg7: memref<4x32xf32, #tpu.memory_space<vmem>>, %arg8: memref<4x32xf32, #tpu.memory_space<vmem>>) attributes {dimension_semantics = [#tpu.dimension_semantics<parallel>], iteration_bounds = array<i64: 1>, scalar_prefetch = 0 : i64, scratch_operands = 0 : i64, tpu.core_type = #tpu.core_type<tc>, window_params = [{transform_indices = @transform_0, window_bounds = array<i64: 4, 128>}, {pipeline_mode = #tpu.pipeline_mode<synchronous>, transform_indices = @transform_1, window_bounds = array<i64: 128, 64>}, {pipeline_mode = #tpu.pipeline_mode<synchronous>, transform_indices = @transform_2, window_bounds = array<i64: 1, 64>}, {pipeline_mode = #tpu.pipeline_mode<synchronous>, transform_indices = @transform_3, window_bounds = array<i64: 64, 32>}, {pipeline_mode = #tpu.pipeline_mode<synchronous>, transform_indices = @transform_4, window_bounds = array<i64: 1, 32>}, {pipeline_mode = #tpu.pipeline_mode<synchronous>, transform_indices = @transform_5, window_bounds = array<i64: 1, 32>}, {transform_indices = @transform_6, window_bounds = array<i64: 4, 32>}, {transform_indices = @transform_7, window_bounds = array<i64: 4, 32>}]} {
    %c0 = arith.constant 0 : index
    %c0_0 = arith.constant 0 : index
    %0 = vector.load %arg1[%c0, %c0_0] : memref<4x128xbf16, #tpu.memory_space<vmem>>, vector<4x128xbf16>
    %c0_1 = arith.constant 0 : index
    %c0_2 = arith.constant 0 : index
    %1 = vector.load %arg2[%c0_1, %c0_2] : memref<128x64xbf16, #tpu.memory_space<vmem>>, vector<128x64xbf16>
    %cst = arith.constant dense<0.000000e+00> : vector<4x64xf32>
    %2 = tpu.matmul %0, %1, %cst {dimension_numbers = #tpu.dot_dimension_numbers<[1], [0], [0], [1], [0, 0, 1, 1], [], []>} : vector<4x128xbf16>, vector<128x64xbf16>, vector<4x64xf32> -> vector<4x64xf32>
    %c0_3 = arith.constant 0 : index
    %c0_4 = arith.constant 0 : index
    %3 = vector.load %arg3[%c0_3, %c0_4] : memref<1x64xf32, #tpu.memory_space<vmem>>, vector<1x64xf32>
    %4 = vector.broadcast %3 : vector<1x64xf32> to vector<4x64xf32>
    %5 = arith.addf %2, %4 : vector<4x64xf32>
    %6 = arith.truncf %5 : vector<4x64xf32> to vector<4x64xbf16>
    %c0_5 = arith.constant 0 : index
    %c0_6 = arith.constant 0 : index
    %7 = vector.load %arg4[%c0_5, %c0_6] : memref<64x32xbf16, #tpu.memory_space<vmem>>, vector<64x32xbf16>
    %cst_7 = arith.constant dense<0.000000e+00> : vector<4x32xf32>
    %8 = tpu.matmul %6, %7, %cst_7 {dimension_numbers = #tpu.dot_dimension_numbers<[1], [0], [0], [1], [0, 0, 1, 1], [], []>} : vector<4x64xbf16>, vector<64x32xbf16>, vector<4x32xf32> -> vector<4x32xf32>
    %c0_8 = arith.constant 0 : index
    %c0_9 = arith.constant 0 : index
    %9 = vector.load %arg5[%c0_8, %c0_9] : memref<1x32xf32, #tpu.memory_space<vmem>>, vector<1x32xf32>
    %10 = vector.broadcast %9 : vector<1x32xf32> to vector<4x32xf32>
    %11 = arith.addf %8, %10 : vector<4x32xf32>
    %c0_10 = arith.constant 0 : index
    %c0_11 = arith.constant 0 : index
    %12 = vector.load %arg7[%c0_10, %c0_11] : memref<4x32xf32, #tpu.memory_space<vmem>>, vector<4x32xf32>
    tpu.vector_store %arg7[%c0_10, %c0_11], %11 {strides = array<i32>} : memref<4x32xf32, #tpu.memory_space<vmem>>, vector<4x32xf32>,
    %c0_12 = arith.constant 0 : index
    %c0_13 = arith.constant 0 : index
    %13 = vector.load %arg6[%c0_12, %c0_13] : memref<1x32xf32, #tpu.memory_space<vmem>>, vector<1x32xf32>
    %14 = vector.broadcast %13 : vector<1x32xf32> to vector<4x32xf32>
    %15 = arith.addf %11, %14 : vector<4x32xf32>
    %c0_14 = arith.constant 0 : index
    %c0_15 = arith.constant 0 : index
    %16 = vector.load %arg8[%c0_14, %c0_15] : memref<4x32xf32, #tpu.memory_space<vmem>>, vector<4x32xf32>
    tpu.vector_store %arg8[%c0_14, %c0_15], %15 {strides = array<i32>} : memref<4x32xf32, #tpu.memory_space<vmem>>, vector<4x32xf32>,
    return
  }
  func.func @transform_0(%arg0: i32) -> (i32, i32) {
    %c0_i32 = arith.constant 0 : i32
    %c0_i32_0 = arith.constant 0 : i32
    return %arg0, %c0_i32 : i32, i32
  }
  func.func @transform_1(%arg0: i32) -> (i32, i32) {
    %c0_i32 = arith.constant 0 : i32
    %c0_i32_0 = arith.constant 0 : i32
    %c0_i32_1 = arith.constant 0 : i32
    return %c0_i32, %c0_i32_0 : i32, i32
  }
  func.func @transform_2(%arg0: i32) -> (i32, i32) {
    %c0_i32 = arith.constant 0 : i32
    %c0_i32_0 = arith.constant 0 : i32
    %c0_i32_1 = arith.constant 0 : i32
    return %c0_i32, %c0_i32_0 : i32, i32
  }
  func.func @transform_3(%arg0: i32) -> (i32, i32) {
    %c0_i32 = arith.constant 0 : i32
    %c0_i32_0 = arith.constant 0 : i32
    %c0_i32_1 = arith.constant 0 : i32
    return %c0_i32, %c0_i32_0 : i32, i32
  }
  func.func @transform_4(%arg0: i32) -> (i32, i32) {
    %c0_i32 = arith.constant 0 : i32
    %c0_i32_0 = arith.constant 0 : i32
    %c0_i32_1 = arith.constant 0 : i32
    return %c0_i32, %c0_i32_0 : i32, i32
  }
  func.func @transform_5(%arg0: i32) -> (i32, i32) {
    %c0_i32 = arith.constant 0 : i32
    %c0_i32_0 = arith.constant 0 : i32
    %c0_i32_1 = arith.constant 0 : i32
    return %c0_i32, %c0_i32_0 : i32, i32
  }
  func.func @transform_6(%arg0: i32) -> (i32, i32) {
    %c0_i32 = arith.constant 0 : i32
    %c0_i32_0 = arith.constant 0 : i32
    return %arg0, %c0_i32 : i32, i32
  }
  func.func @transform_7(%arg0: i32) -> (i32, i32) {
    %c0_i32 = arith.constant 0 : i32
    %c0_i32_0 = arith.constant 0 : i32
    return %arg0, %c0_i32 : i32, i32
  }
}

module attributes {stable_mosaic.version = 11 : i64} {
  func.func @_fpn_level_kernel(%arg0: i32, %arg1: memref<16x32xbf16, #tpu.memory_space<vmem>>, %arg2: memref<32x32xbf16, #tpu.memory_space<vmem>>, %arg3: memref<1x32xf32, #tpu.memory_space<vmem>>, %arg4: memref<16x4xf32, #tpu.memory_space<vmem>>, %arg5: memref<4x32xf32, #tpu.memory_space<vmem>>, %arg6: memref<32x8xbf16, #tpu.memory_space<vmem>>, %arg7: memref<1x8xf32, #tpu.memory_space<vmem>>, %arg8: memref<16x32xf32, #tpu.memory_space<vmem>>, %arg9: memref<16x8xf32, #tpu.memory_space<vmem>>) attributes {dimension_semantics = [#tpu.dimension_semantics<parallel>], iteration_bounds = array<i64: 1>, scalar_prefetch = 0 : i64, scratch_operands = 0 : i64, tpu.core_type = #tpu.core_type<tc>, window_params = [{transform_indices = @transform_0, window_bounds = array<i64: 16, 32>}, {pipeline_mode = #tpu.pipeline_mode<synchronous>, transform_indices = @transform_1, window_bounds = array<i64: 32, 32>}, {pipeline_mode = #tpu.pipeline_mode<synchronous>, transform_indices = @transform_2, window_bounds = array<i64: 1, 32>}, {pipeline_mode = #tpu.pipeline_mode<synchronous>, transform_indices = @transform_3, window_bounds = array<i64: 16, 4>}, {transform_indices = @transform_4, window_bounds = array<i64: 4, 32>}, {pipeline_mode = #tpu.pipeline_mode<synchronous>, transform_indices = @transform_5, window_bounds = array<i64: 32, 8>}, {pipeline_mode = #tpu.pipeline_mode<synchronous>, transform_indices = @transform_6, window_bounds = array<i64: 1, 8>}, {transform_indices = @transform_7, window_bounds = array<i64: 16, 32>}, {transform_indices = @transform_8, window_bounds = array<i64: 16, 8>}]} {
    %c0 = arith.constant 0 : index
    %c0_0 = arith.constant 0 : index
    %0 = vector.load %arg1[%c0, %c0_0] : memref<16x32xbf16, #tpu.memory_space<vmem>>, vector<16x32xbf16>
    %c0_1 = arith.constant 0 : index
    %c0_2 = arith.constant 0 : index
    %1 = vector.load %arg2[%c0_1, %c0_2] : memref<32x32xbf16, #tpu.memory_space<vmem>>, vector<32x32xbf16>
    %cst = arith.constant dense<0.000000e+00> : vector<16x32xf32>
    %2 = tpu.matmul %0, %1, %cst {dimension_numbers = #tpu.dot_dimension_numbers<[1], [0], [0], [1], [0, 0, 1, 1], [], []>} : vector<16x32xbf16>, vector<32x32xbf16>, vector<16x32xf32> -> vector<16x32xf32>
    %c0_3 = arith.constant 0 : index
    %c0_4 = arith.constant 0 : index
    %3 = vector.load %arg3[%c0_3, %c0_4] : memref<1x32xf32, #tpu.memory_space<vmem>>, vector<1x32xf32>
    %4 = vector.broadcast %3 : vector<1x32xf32> to vector<16x32xf32>
    %5 = arith.addf %2, %4 : vector<16x32xf32>
    %c0_5 = arith.constant 0 : index
    %c0_6 = arith.constant 0 : index
    %6 = vector.load %arg4[%c0_5, %c0_6] : memref<16x4xf32, #tpu.memory_space<vmem>>, vector<16x4xf32>
    %c0_7 = arith.constant 0 : index
    %c0_8 = arith.constant 0 : index
    %7 = vector.load %arg5[%c0_7, %c0_8] : memref<4x32xf32, #tpu.memory_space<vmem>>, vector<4x32xf32>
    %cst_9 = arith.constant dense<0.000000e+00> : vector<16x32xf32>
    %8 = tpu.matmul %6, %7, %cst_9 {dimension_numbers = #tpu.dot_dimension_numbers<[1], [0], [0], [1], [0, 0, 1, 1], [], []>} : vector<16x4xf32>, vector<4x32xf32>, vector<16x32xf32> -> vector<16x32xf32>
    %9 = arith.addf %5, %8 : vector<16x32xf32>
    %10 = arith.truncf %9 : vector<16x32xf32> to vector<16x32xbf16>
    %c0_10 = arith.constant 0 : index
    %c0_11 = arith.constant 0 : index
    %11 = vector.load %arg6[%c0_10, %c0_11] : memref<32x8xbf16, #tpu.memory_space<vmem>>, vector<32x8xbf16>
    %cst_12 = arith.constant dense<0.000000e+00> : vector<16x8xf32>
    %12 = tpu.matmul %10, %11, %cst_12 {dimension_numbers = #tpu.dot_dimension_numbers<[1], [0], [0], [1], [0, 0, 1, 1], [], []>} : vector<16x32xbf16>, vector<32x8xbf16>, vector<16x8xf32> -> vector<16x8xf32>
    %c0_13 = arith.constant 0 : index
    %c0_14 = arith.constant 0 : index
    %13 = vector.load %arg7[%c0_13, %c0_14] : memref<1x8xf32, #tpu.memory_space<vmem>>, vector<1x8xf32>
    %14 = vector.broadcast %13 : vector<1x8xf32> to vector<16x8xf32>
    %15 = arith.addf %12, %14 : vector<16x8xf32>
    %c0_15 = arith.constant 0 : index
    %c0_16 = arith.constant 0 : index
    %16 = vector.load %arg8[%c0_15, %c0_16] : memref<16x32xf32, #tpu.memory_space<vmem>>, vector<16x32xf32>
    tpu.vector_store %arg8[%c0_15, %c0_16], %9 {strides = array<i32>} : memref<16x32xf32, #tpu.memory_space<vmem>>, vector<16x32xf32>,
    %c0_17 = arith.constant 0 : index
    %c0_18 = arith.constant 0 : index
    %17 = vector.load %arg9[%c0_17, %c0_18] : memref<16x8xf32, #tpu.memory_space<vmem>>, vector<16x8xf32>
    tpu.vector_store %arg9[%c0_17, %c0_18], %15 {strides = array<i32>} : memref<16x8xf32, #tpu.memory_space<vmem>>, vector<16x8xf32>,
    return
  }
  func.func @transform_0(%arg0: i32) -> (i32, i32) {
    %c0_i32 = arith.constant 0 : i32
    %c0_i32_0 = arith.constant 0 : i32
    return %arg0, %c0_i32 : i32, i32
  }
  func.func @transform_1(%arg0: i32) -> (i32, i32) {
    %c0_i32 = arith.constant 0 : i32
    %c0_i32_0 = arith.constant 0 : i32
    %c0_i32_1 = arith.constant 0 : i32
    return %c0_i32, %c0_i32_0 : i32, i32
  }
  func.func @transform_2(%arg0: i32) -> (i32, i32) {
    %c0_i32 = arith.constant 0 : i32
    %c0_i32_0 = arith.constant 0 : i32
    %c0_i32_1 = arith.constant 0 : i32
    return %c0_i32, %c0_i32_0 : i32, i32
  }
  func.func @transform_3(%arg0: i32) -> (i32, i32) {
    %c0_i32 = arith.constant 0 : i32
    %c0_i32_0 = arith.constant 0 : i32
    %c0_i32_1 = arith.constant 0 : i32
    return %c0_i32, %c0_i32_0 : i32, i32
  }
  func.func @transform_4(%arg0: i32) -> (i32, i32) {
    %c0_i32 = arith.constant 0 : i32
    %c0_i32_0 = arith.constant 0 : i32
    return %arg0, %c0_i32 : i32, i32
  }
  func.func @transform_5(%arg0: i32) -> (i32, i32) {
    %c0_i32 = arith.constant 0 : i32
    %c0_i32_0 = arith.constant 0 : i32
    %c0_i32_1 = arith.constant 0 : i32
    return %c0_i32, %c0_i32_0 : i32, i32
  }
  func.func @transform_6(%arg0: i32) -> (i32, i32) {
    %c0_i32 = arith.constant 0 : i32
    %c0_i32_0 = arith.constant 0 : i32
    %c0_i32_1 = arith.constant 0 : i32
    return %c0_i32, %c0_i32_0 : i32, i32
  }
  func.func @transform_7(%arg0: i32) -> (i32, i32) {
    %c0_i32 = arith.constant 0 : i32
    %c0_i32_0 = arith.constant 0 : i32
    return %arg0, %c0_i32 : i32, i32
  }
  func.func @transform_8(%arg0: i32) -> (i32, i32) {
    %c0_i32 = arith.constant 0 : i32
    %c0_i32_0 = arith.constant 0 : i32
    return %arg0, %c0_i32 : i32, i32
  }
}

module attributes {stable_mosaic.version = 11 : i64} {
  func.func @_fpn_level_kernel(%arg0: i32, %arg1: memref<32x16xbf16, #tpu.memory_space<vmem>>, %arg2: memref<16x32xbf16, #tpu.memory_space<vmem>>, %arg3: memref<1x32xf32, #tpu.memory_space<vmem>>, %arg4: memref<32x8xf32, #tpu.memory_space<vmem>>, %arg5: memref<8x32xf32, #tpu.memory_space<vmem>>, %arg6: memref<32x4xbf16, #tpu.memory_space<vmem>>, %arg7: memref<1x4xf32, #tpu.memory_space<vmem>>, %arg8: memref<32x4xf32, #tpu.memory_space<vmem>>) attributes {dimension_semantics = [#tpu.dimension_semantics<parallel>], iteration_bounds = array<i64: 2>, scalar_prefetch = 0 : i64, scratch_operands = 0 : i64, tpu.core_type = #tpu.core_type<tc>, window_params = [{transform_indices = @transform_0, window_bounds = array<i64: 32, 16>}, {pipeline_mode = #tpu.pipeline_mode<synchronous>, transform_indices = @transform_1, window_bounds = array<i64: 16, 32>}, {pipeline_mode = #tpu.pipeline_mode<synchronous>, transform_indices = @transform_2, window_bounds = array<i64: 1, 32>}, {pipeline_mode = #tpu.pipeline_mode<synchronous>, transform_indices = @transform_3, window_bounds = array<i64: 32, 8>}, {transform_indices = @transform_4, window_bounds = array<i64: 8, 32>}, {pipeline_mode = #tpu.pipeline_mode<synchronous>, transform_indices = @transform_5, window_bounds = array<i64: 32, 4>}, {pipeline_mode = #tpu.pipeline_mode<synchronous>, transform_indices = @transform_6, window_bounds = array<i64: 1, 4>}, {transform_indices = @transform_7, window_bounds = array<i64: 32, 4>}]} {
    %c0 = arith.constant 0 : index
    %c0_0 = arith.constant 0 : index
    %0 = vector.load %arg1[%c0, %c0_0] : memref<32x16xbf16, #tpu.memory_space<vmem>>, vector<32x16xbf16>
    %c0_1 = arith.constant 0 : index
    %c0_2 = arith.constant 0 : index
    %1 = vector.load %arg2[%c0_1, %c0_2] : memref<16x32xbf16, #tpu.memory_space<vmem>>, vector<16x32xbf16>
    %cst = arith.constant dense<0.000000e+00> : vector<32x32xf32>
    %2 = tpu.matmul %0, %1, %cst {dimension_numbers = #tpu.dot_dimension_numbers<[1], [0], [0], [1], [0, 0, 1, 1], [], []>} : vector<32x16xbf16>, vector<16x32xbf16>, vector<32x32xf32> -> vector<32x32xf32>
    %c0_3 = arith.constant 0 : index
    %c0_4 = arith.constant 0 : index
    %3 = vector.load %arg3[%c0_3, %c0_4] : memref<1x32xf32, #tpu.memory_space<vmem>>, vector<1x32xf32>
    %4 = vector.broadcast %3 : vector<1x32xf32> to vector<32x32xf32>
    %5 = arith.addf %2, %4 : vector<32x32xf32>
    %c0_5 = arith.constant 0 : index
    %c0_6 = arith.constant 0 : index
    %6 = vector.load %arg4[%c0_5, %c0_6] : memref<32x8xf32, #tpu.memory_space<vmem>>, vector<32x8xf32>
    %c0_7 = arith.constant 0 : index
    %c0_8 = arith.constant 0 : index
    %7 = vector.load %arg5[%c0_7, %c0_8] : memref<8x32xf32, #tpu.memory_space<vmem>>, vector<8x32xf32>
    %cst_9 = arith.constant dense<0.000000e+00> : vector<32x32xf32>
    %8 = tpu.matmul %6, %7, %cst_9 {dimension_numbers = #tpu.dot_dimension_numbers<[1], [0], [0], [1], [0, 0, 1, 1], [], []>} : vector<32x8xf32>, vector<8x32xf32>, vector<32x32xf32> -> vector<32x32xf32>
    %9 = arith.addf %5, %8 : vector<32x32xf32>
    %10 = arith.truncf %9 : vector<32x32xf32> to vector<32x32xbf16>
    %c0_10 = arith.constant 0 : index
    %c0_11 = arith.constant 0 : index
    %11 = vector.load %arg6[%c0_10, %c0_11] : memref<32x4xbf16, #tpu.memory_space<vmem>>, vector<32x4xbf16>
    %cst_12 = arith.constant dense<0.000000e+00> : vector<32x4xf32>
    %12 = tpu.matmul %10, %11, %cst_12 {dimension_numbers = #tpu.dot_dimension_numbers<[1], [0], [0], [1], [0, 0, 1, 1], [], []>} : vector<32x32xbf16>, vector<32x4xbf16>, vector<32x4xf32> -> vector<32x4xf32>
    %c0_13 = arith.constant 0 : index
    %c0_14 = arith.constant 0 : index
    %13 = vector.load %arg7[%c0_13, %c0_14] : memref<1x4xf32, #tpu.memory_space<vmem>>, vector<1x4xf32>
    %14 = vector.broadcast %13 : vector<1x4xf32> to vector<32x4xf32>
    %15 = arith.addf %12, %14 : vector<32x4xf32>
    %c0_15 = arith.constant 0 : index
    %c0_16 = arith.constant 0 : index
    %16 = vector.load %arg8[%c0_15, %c0_16] : memref<32x4xf32, #tpu.memory_space<vmem>>, vector<32x4xf32>
    tpu.vector_store %arg8[%c0_15, %c0_16], %15 {strides = array<i32>} : memref<32x4xf32, #tpu.memory_space<vmem>>, vector<32x4xf32>,
    return
  }
  func.func @transform_0(%arg0: i32) -> (i32, i32) {
    %c0_i32 = arith.constant 0 : i32
    %c0_i32_0 = arith.constant 0 : i32
    return %arg0, %c0_i32 : i32, i32
  }
  func.func @transform_1(%arg0: i32) -> (i32, i32) {
    %c0_i32 = arith.constant 0 : i32
    %c0_i32_0 = arith.constant 0 : i32
    %c0_i32_1 = arith.constant 0 : i32
    return %c0_i32, %c0_i32_0 : i32, i32
  }
  func.func @transform_2(%arg0: i32) -> (i32, i32) {
    %c0_i32 = arith.constant 0 : i32
    %c0_i32_0 = arith.constant 0 : i32
    %c0_i32_1 = arith.constant 0 : i32
    return %c0_i32, %c0_i32_0 : i32, i32
  }
  func.func @transform_3(%arg0: i32) -> (i32, i32) {
    %c0_i32 = arith.constant 0 : i32
    %c0_i32_0 = arith.constant 0 : i32
    %c0_i32_1 = arith.constant 0 : i32
    return %c0_i32, %c0_i32_0 : i32, i32
  }
  func.func @transform_4(%arg0: i32) -> (i32, i32) {
    %c0_i32 = arith.constant 0 : i32
    %c0_i32_0 = arith.constant 0 : i32
    return %arg0, %c0_i32 : i32, i32
  }
  func.func @transform_5(%arg0: i32) -> (i32, i32) {
    %c0_i32 = arith.constant 0 : i32
    %c0_i32_0 = arith.constant 0 : i32
    %c0_i32_1 = arith.constant 0 : i32
    return %c0_i32, %c0_i32_0 : i32, i32
  }
  func.func @transform_6(%arg0: i32) -> (i32, i32) {
    %c0_i32 = arith.constant 0 : i32
    %c0_i32_0 = arith.constant 0 : i32
    %c0_i32_1 = arith.constant 0 : i32
    return %c0_i32, %c0_i32_0 : i32, i32
  }
  func.func @transform_7(%arg0: i32) -> (i32, i32) {
    %c0_i32 = arith.constant 0 : i32
    %c0_i32_0 = arith.constant 0 : i32
    return %arg0, %c0_i32 : i32, i32
  }
}

</mosaic_0001>

<llo_original>
// kernel: sam2_image_encoder_forward.5
$region0: #{sam2_image_encoder_forward.5}
  #allocation0 [shape = 'u32[]', space=smem, size = 0x4, offset = 0x4, fixed_abs, tag = 'smem constant byte address 0x4 - core index']
  #allocation1 [shape = 'u32[72,128]{1,0:T(1,128)}', space=vmem, size = 0x9000, scoped, tag = 'internal scratch']
  %s0 = inlined_call_operand.vmem [shape: bf16[64,48], index: 0, kind: input, shape index: {}]
  %s1 = inlined_call_operand.vmem [shape: bf16[48,16], index: 1, kind: input, shape index: {}]
  %s2 = inlined_call_operand.vmem [shape: f32[1,16], index: 2, kind: input, shape index: {}]
  %s3 = inlined_call_operand.vmem [shape: bf16[64,16], index: 3, kind: output, shape index: {}]
  %s4 = sld [smem:[#allocation0]]
  $region45: #{sam2_image_encoder_forward.5} parent=0
    _
  %s6 = ssub.s32 1, %s4
  %s7 = scalar_select 0, %s6, %s4
  loop: start=0, step=1, limit=4
  $region2: #{sam2_image_encoder_forward.5} parent=0 // loop_pre_header
    _
  $region3: #{sam2_image_encoder_forward.5} parent=0 // loop_header
    %s9 = sphi 0, %s13
    %p10 = scmp.ge.s32.totalorder %s9, 4
    %s19 = sphi 0, %s21
    %s22 = sphi 0, %s19
    %s23 = sphi 0, %s22
    %s39 = sphi 0, %s23
    %s43 = sphi 0, %s43
    %s45 = sphi 0, %s43
    %s46 = sphi 0, %s45
    %s60 = sphi 0, %s46
    %s64 = sphi 0, %s64
    %s66 = sphi 0, %s64
    %s67 = sphi 0, %s66
    %s81 = sphi 0, %s67
    %s87 = sphi 0, %s89
    %s90 = sphi 0, %s87
    %s91 = sphi 0, %s90
    %s107 = sphi 0, %s91
  $region4: #{sam2_image_encoder_forward.5} parent=0 // loop_header_branch
    %12 = sbr.rel (%p10) target = $region8
  $region5: #{sam2_image_encoder_forward.5} parent=0 // loop_body
    %s14 = ssub.s32 %s9, 1
    %s15 = ssub.s32 %s9, 2
    %s16 = sadd.s32 %s9, 1
    %s17 = ssub.s32 %s9, %s16
    %p18 = scmp.eq.s32.totalorder %s17, 0
    %s20 = sadd.s32 %s19, 1
    %s21 = scalar_select %p18, %s19, %s20
    %p24 = pneg %p18
    %p25 = scmp.eq.s32.totalorder %s9, 1
    %p26 = por %p24, %p25
    %p27 = scmp.ne.s32.totalorder %s19, %s22
    %p28 = scmp.eq.s32.totalorder %s9, 0
    %p29 = por %p27, %p28
    %p30 = scmp.ne.s32.totalorder %s19, %s22
    %p31 = scmp.eq.s32.totalorder %s14, 1
    %p32 = por %p30, %p31
    %p33 = scmp.ne.s32.totalorder %s22, %s23
    %p34 = scmp.eq.s32.totalorder %s14, 0
    %p35 = por %p33, %p34
    %p36 = scmp.ne.s32.totalorder %s22, %s23
    %p37 = scmp.eq.s32.totalorder %s15, 1
    %p38 = por %p36, %p37
    %p40 = scmp.ne.s32.totalorder %s23, %s39
    %p41 = scmp.eq.s32.totalorder %s15, 0
    %p42 = por %p40, %p41
    %s44 = sadd.s32 %s43, 1
    %p47 = scmp.eq.s32.totalorder %s9, 1
    %p48 = scmp.ne.s32.totalorder %s43, %s45
    %p49 = scmp.eq.s32.totalorder %s9, 0
    %p50 = por %p48, %p49
    %p51 = scmp.ne.s32.totalorder %s43, %s45
    %p52 = scmp.eq.s32.totalorder %s14, 1
    %p53 = por %p51, %p52
    %p54 = scmp.ne.s32.totalorder %s45, %s46
    %p55 = scmp.eq.s32.totalorder %s14, 0
    %p56 = por %p54, %p55
    %p57 = scmp.ne.s32.totalorder %s45, %s46
    %p58 = scmp.eq.s32.totalorder %s15, 1
    %p59 = por %p57, %p58
    %p61 = scmp.ne.s32.totalorder %s46, %s60
    %p62 = scmp.eq.s32.totalorder %s15, 0
    %p63 = por %p61, %p62
    %s65 = sadd.s32 %s64, 1
    %p68 = scmp.eq.s32.totalorder %s9, 1
    %p69 = scmp.ne.s32.totalorder %s64, %s66
    %p70 = scmp.eq.s32.totalorder %s9, 0
    %p71 = por %p69, %p70
    %p72 = scmp.ne.s32.totalorder %s64, %s66
    %p73 = scmp.eq.s32.totalorder %s14, 1
    %p74 = por %p72, %p73
    %p75 = scmp.ne.s32.totalorder %s66, %s67
    %p76 = scmp.eq.s32.totalorder %s14, 0
    %p77 = por %p75, %p76
    %p78 = scmp.ne.s32.totalorder %s66, %s67
    %p79 = scmp.eq.s32.totalorder %s15, 1
    %p80 = por %p78, %p79
    %p82 = scmp.ne.s32.totalorder %s67, %s81
    %p83 = scmp.eq.s32.totalorder %s15, 0
    %p84 = por %p82, %p83
    %s85 = ssub.s32 %s9, %s16
    %p86 = scmp.eq.s32.totalorder %s85, 0
    %s88 = sadd.s32 %s87, 1
    %s89 = scalar_select %p86, %s87, %s88
    %p92 = pneg %p86
    %p93 = scmp.eq.s32.totalorder %s9, 1
    %p94 = por %p92, %p93
    %p95 = scmp.ne.s32.totalorder %s87, %s90
    %p96 = scmp.eq.s32.totalorder %s9, 0
    %p97 = por %p95, %p96
    %p98 = scmp.ne.s32.totalorder %s87, %s90
    %p99 = scmp.eq.s32.totalorder %s14, 1
    %p100 = por %p98, %p99
    %p101 = scmp.ne.s32.totalorder %s90, %s91
    %p102 = scmp.eq.s32.totalorder %s14, 0
    %p103 = por %p101, %p102
    %p104 = scmp.ne.s32.totalorder %s90, %s91
    %p105 = scmp.eq.s32.totalorder %s15, 1
    %p106 = por %p104, %p105
    %p108 = scmp.ne.s32.totalorder %s91, %s107
    %p109 = scmp.eq.s32.totalorder %s15, 0
    %p110 = por %p108, %p109
    %p111 = scmp.le.s32.totalorder 1, %s9
    %p112 = scmp.lt.s32.totalorder %s9, 3
    %p113 = pnand %p111, %p112
    %p114 = pneg %p113
    // Predicated region
    $region9: #{sam2_image_encoder_forward.5} parent=5 // pred_check
      _
    $region10: #{sam2_image_encoder_forward.5} parent=5 // pred_check_branch
      %116 = sbr.rel (%p113) target = $region12
    $region11: #{sam2_image_encoder_forward.5} parent=5 // pred_region
      %s117 = ssub.s32 %s9, 1
      // Predicated region
      $region13: #{sam2_image_encoder_forward.5} parent=11 // pred_check
        %p118 = pneg %p56
      $region14: #{sam2_image_encoder_forward.5} parent=11 // pred_check_branch
        %120 = sbr.rel (%p118) target = $region16
      $region15: #{sam2_image_encoder_forward.5} parent=11 // pred_region
        _
      $region16: #{sam2_image_encoder_forward.5} parent=11 // pred_fallthru
        _
      // Predicated region
      $region17: #{sam2_image_encoder_forward.5} parent=11 // pred_check
        %p121 = pneg %p77
      $region18: #{sam2_image_encoder_forward.5} parent=11 // pred_check_branch
        %123 = sbr.rel (%p121) target = $region20
      $region19: #{sam2_image_encoder_forward.5} parent=11 // pred_region
        _
      $region20: #{sam2_image_encoder_forward.5} parent=11 // pred_fallthru
        _
    $region12: #{sam2_image_encoder_forward.5} parent=5 // pred_fallthru
      _
    %p124 = scmp.lt.s32.totalorder %s9, 2
    // Predicated region
    $region21: #{sam2_image_encoder_forward.5} parent=5 // pred_check
      %p125 = pneg %p124
    $region22: #{sam2_image_encoder_forward.5} parent=5 // pred_check_branch
      %127 = sbr.rel (%p125) target = $region24
    $region23: #{sam2_image_encoder_forward.5} parent=5 // pred_region
      // Predicated region
      $region25: #{sam2_image_encoder_forward.5} parent=23 // pred_check
        %p128 = pneg %p29
      $region26: #{sam2_image_encoder_forward.5} parent=23 // pred_check_branch
        %130 = sbr.rel (%p128) target = $region28
      $region27: #{sam2_image_encoder_forward.5} parent=23 // pred_region
        %s131 = smul.u32 4, %s9
        %p132 = scmp.lt.s32.totalorder %s131, 7
        %s133 = scalar_select %p132, %s131, 7
        %s134 = smul.addr %s133, 4
        %s135 = scalar_lea.vmem %s0, %s134
        %s136 = smul.u32 4, %s9
      $region28: #{sam2_image_encoder_forward.5} parent=23 // pred_fallthru
        _
    $region24: #{sam2_image_encoder_forward.5} parent=5 // pred_fallthru
      _
    %p137 = scmp.le.s32.totalorder 1, %s9
    %p138 = scmp.lt.s32.totalorder %s9, 3
    %p139 = pnand %p137, %p138
    %p140 = pneg %p139
    // Predicated region
    $region29: #{sam2_image_encoder_forward.5} parent=5 // pred_check
      _
    $region30: #{sam2_image_encoder_forward.5} parent=5 // pred_check_branch
      %142 = sbr.rel (%p139) target = $region32
    $region31: #{sam2_image_encoder_forward.5} parent=5 // pred_region
      %s143 = ssub.s32 %s9, 1
      %s144 = smul.u32 4, %s14
      %p145 = scmp.lt.s32.totalorder %s144, 7
      %s146 = scalar_select %p145, %s144, 7
      %s147 = smul.addr %s146, 4
      %s148 = scalar_lea.vmem %s0, %s147
      %p149 = pneg %p35
      %p150 = pneg %p32
      %p151 = pneg %p56
      %p152 = pneg %p53
      %p153 = pneg %p77
      %p154 = pneg %p74
      %p155 = pneg %p103
      %p156 = pneg %p100
      %s157 = smul.u32 4, %s14
      %p158 = scmp.lt.s32.totalorder %s157, 7
      %s159 = scalar_select %p158, %s157, 7
      %s160 = smul.addr %s159, 4
      %s161 = scalar_lea.vmem %s3, %s160
      %s162 = smul.u32 4, %s14
      %p163 = scmp.lt.s32.totalorder %s162, 7
      %s164 = scalar_select %p163, %s162, 7
      %s165 = smul.addr %s164, 4
      %s166 = scalar_lea.vmem %s0, %s165
      %s167 = smul.u32 4, %s14
      %s168 = smul.u32 4, %s14
      %p169 = scmp.lt.s32.totalorder %s168, 7
      %s170 = scalar_select %p169, %s168, 7
      %s171 = smul.addr %s170, 4
      %s172 = scalar_lea.vmem %s3, %s171
      %s173 = smul.u32 4, %s14
      %v175 = vld [vmem:[%s166] sm:$0xf]
      %v176 = vld [vmem:[%s166 + $0x4] sm:$0xf]
      %v177 = vld [vmem:[%s166 + $0x8] sm:$0xf]
      %v178 = vld [vmem:[%s166 + $0xc] sm:$0xf]
      %v179 = vld [vmem:[%s1] sm:$0xf]
      %v180 = vld [vmem:[%s1 + $0x4] sm:$0xf]
      %v181 = vld [vmem:[%s1 + $0x8] sm:$0xf]
      %v182 = vld [vmem:[%s1 + $0xc] sm:$0xf]
      %v183 = vld [vmem:[%s1 + $0x10] sm:$0xf]
      %v184 = vld [vmem:[%s1 + $0x14] sm:$0xf]
      %v185 = vld [vmem:[%s2] sm:$0x1]
      %v187 = vperm.slane %v185, 0
      %v193 = vunpack.c.l.b16 %v175
      %v194 = vunpack.c.l.b16 %v176
      %v195 = vunpack.c.l.b16 %v177
      %v196 = vunpack.c.l.b16 %v178
      %v197 = vpack.c.b16 %v194, %v193
      %v198 = vpack.c.b16 %v196, %v195
      %v205 = vunpack.c.l.b16 %v179
      %v206 = vunpack.c.l.b16 %v180
      %v207 = vunpack.c.l.b16 %v181
      %v208 = vunpack.c.l.b16 %v182
      %v209 = vunpack.c.l.b16 %v183
      %v210 = vunpack.c.l.b16 %v184
      %v211 = vpack.c.b16 %v206, %v205
      %v212 = vpack.c.b16 %v208, %v207
      %v213 = vpack.c.b16 %v210, %v209
      %vm217 = vcmask 392192
      %v219 = vsel %vm217, %v197, 0
      %v222 = vsel %vm217, %v198, 0
      %224 = vmatpush.bf16.msra.mxu0 0
      %225 = vmatpush.bf16.msra.mxu0 0
      %226 = vmatpush.bf16.msra.mxu0 0
      %227 = vmatpush.bf16.msra.mxu0 0
      %228 = vmatpush.bf16.msra.mxu0 0
      %229 = vmatpush.bf16.msra.mxu0 %v213
      %230 = vmatpush.bf16.msra.mxu0 %v212
      %231 = vmatpush.bf16.msra.mxu0 %v211
      %232 = vmatmul.bf16.gmra.mxu0 %v219
      %v233 = vpop.f32.mrf.mxu0
      %v234 = vadd.f32 %v187, %v233
      %v235 = vpop.f32.mrf.mxu0
      %v236 = vadd.f32 %v187, %v235
      %237 = vmatmul.bf16.gmra.mxu0 %v222
      %v238 = vpop.f32.mrf.mxu0
      %v239 = vadd.f32 %v187, %v238
      %v240 = vpop.f32.mrf.mxu0
      %v241 = vadd.f32 %v187, %v240
      %242 = vdwg.mxu0
      %v243 = vpack.c.bf16 %v234, %v234
      %v244 = vpack.c.bf16 %v236, %v236
      %v245 = vpack.c.bf16 %v239, %v239
      %v246 = vpack.c.bf16 %v241, %v241
      %vm247 = vcmask 125952
      %248 = vst.msk [vmem:[%s172] sm:$0xf] %vm247, %v243
      %249 = vst.msk [vmem:[%s172 + $0x4] sm:$0xf] %vm247, %v244
      %250 = vst.msk [vmem:[%s172 + $0x8] sm:$0xf] %vm247, %v245
      %251 = vst.msk [vmem:[%s172 + $0xc] sm:$0xf] %vm247, %v246
      %s252 = smul.u32 4, %s14
      %p253 = scmp.lt.s32.totalorder %s252, 7
      %s254 = scalar_select %p253, %s252, 7
      %s255 = smul.addr %s254, 4
      %s256 = scalar_lea.vmem %s3, %s255
      // Predicated region
      $region33: #{sam2_image_encoder_forward.5} parent=31 // pred_check
        %p257 = pneg %p100
      $region34: #{sam2_image_encoder_forward.5} parent=31 // pred_check_branch
        %259 = sbr.rel (%p257) target = $region36
      $region35: #{sam2_image_encoder_forward.5} parent=31 // pred_region
        %s260 = smul.u32 4, %s14
      $region36: #{sam2_image_encoder_forward.5} parent=31 // pred_fallthru
        _
    $region32: #{sam2_image_encoder_forward.5} parent=5 // pred_fallthru
      _
    %p261 = scmp.le.s32.totalorder 2, %s9
    // Predicated region
    $region37: #{sam2_image_encoder_forward.5} parent=5 // pred_check
      %p262 = pneg %p261
    $region38: #{sam2_image_encoder_forward.5} parent=5 // pred_check_branch
      %264 = sbr.rel (%p262) target = $region40
    $region39: #{sam2_image_encoder_forward.5} parent=5 // pred_region
      %s265 = ssub.s32 %s9, 2
      // Predicated region
      $region41: #{sam2_image_encoder_forward.5} parent=39 // pred_check
        %p266 = pneg %p106
      $region42: #{sam2_image_encoder_forward.5} parent=39 // pred_check_branch
        %268 = sbr.rel (%p266) target = $region44
      $region43: #{sam2_image_encoder_forward.5} parent=39 // pred_region
        %s269 = smul.u32 4, %s15
        %p270 = scmp.lt.s32.totalorder %s269, 7
        %s271 = scalar_select %p270, %s269, 7
        %s272 = smul.addr %s271, 4
        %s273 = scalar_lea.vmem %s3, %s272
      $region44: #{sam2_image_encoder_forward.5} parent=39 // pred_fallthru
        _
    $region40: #{sam2_image_encoder_forward.5} parent=5 // pred_fallthru
      _
  $region6: #{sam2_image_encoder_forward.5} parent=0 // loop_footer
    %s13 = sadd.s32 1, %s9
  $region7: #{sam2_image_encoder_forward.5} parent=0 // loop_footer_branch
    %8 = sbr.rel target = $region3
  $region8: #{sam2_image_encoder_forward.5} parent=0 // loop_exit
    _

// kernel: sam2_image_encoder_forward.6
$region0: #{sam2_image_encoder_forward.6}
  #allocation0 [shape = 'u32[]', space=smem, size = 0x4, offset = 0x4, fixed_abs, tag = 'smem constant byte address 0x4 - core index']
  #allocation1 [shape = 'u32[72,128]{1,0:T(1,128)}', space=vmem, size = 0x9000, scoped, tag = 'internal scratch']
  %s0 = inlined_call_operand.vmem [shape: bf16[16,64], index: 0, kind: input, shape index: {}]
  %s1 = inlined_call_operand.vmem [shape: bf16[64,32], index: 1, kind: input, shape index: {}]
  %s2 = inlined_call_operand.vmem [shape: f32[1,32], index: 2, kind: input, shape index: {}]
  %s3 = inlined_call_operand.vmem [shape: bf16[16,32], index: 3, kind: output, shape index: {}]
  %s4 = sld [smem:[#allocation0]]
  $region22: #{sam2_image_encoder_forward.6} parent=0
    _
  %s6 = ssub.s32 1, %s4
  %s7 = scalar_select 0, %s6, %s4
  // Predicated region
  $region2: #{sam2_image_encoder_forward.6} parent=0 // pred_check
    _
  $region3: #{sam2_image_encoder_forward.6} parent=0 // pred_check_branch
    %9 = sbr.rel (0) target = $region5
  $region4: #{sam2_image_encoder_forward.6} parent=0 // pred_region
    _
  $region5: #{sam2_image_encoder_forward.6} parent=0 // pred_fallthru
    _
  // Predicated region
  $region6: #{sam2_image_encoder_forward.6} parent=0 // pred_check
    _
  $region7: #{sam2_image_encoder_forward.6} parent=0 // pred_check_branch
    %11 = sbr.rel (0) target = $region9
  $region8: #{sam2_image_encoder_forward.6} parent=0 // pred_region
    _
  $region9: #{sam2_image_encoder_forward.6} parent=0 // pred_fallthru
    _
  // Predicated region
  $region10: #{sam2_image_encoder_forward.6} parent=0 // pred_check
    _
  $region11: #{sam2_image_encoder_forward.6} parent=0 // pred_check_branch
    %13 = sbr.rel (0) target = $region13
  $region12: #{sam2_image_encoder_forward.6} parent=0 // pred_region
    _
  $region13: #{sam2_image_encoder_forward.6} parent=0 // pred_fallthru
    _
  %v15 = vld [vmem:[%s0] sm:$0xf]
  %v16 = vld [vmem:[%s0 + $0x4] sm:$0xf]
  %v17 = vld [vmem:[%s1] sm:$0xf]
  %v18 = vld [vmem:[%s1 + $0x4] sm:$0xf]
  %v19 = vld [vmem:[%s1 + $0x8] sm:$0xf]
  %v20 = vld [vmem:[%s1 + $0xc] sm:$0xf]
  %v21 = vld [vmem:[%s1 + $0x10] sm:$0xf]
  %v22 = vld [vmem:[%s1 + $0x14] sm:$0xf]
  %v23 = vld [vmem:[%s1 + $0x18] sm:$0xf]
  %v24 = vld [vmem:[%s1 + $0x1c] sm:$0xf]
  %v25 = vld [vmem:[%s2] sm:$0x1]
  %v27 = vperm.slane %v25, 0
  %v31 = vunpack.c.l.b16 %v15
  %v32 = vunpack.c.l.b16 %v16
  %v33 = vpack.c.b16 %v32, %v31
  %v42 = vunpack.c.l.b16 %v17
  %v43 = vunpack.c.l.b16 %v18
  %v44 = vunpack.c.l.b16 %v19
  %v45 = vunpack.c.l.b16 %v20
  %v46 = vunpack.c.l.b16 %v21
  %v47 = vunpack.c.l.b16 %v22
  %v48 = vunpack.c.l.b16 %v23
  %v49 = vunpack.c.l.b16 %v24
  %v50 = vpack.c.b16 %v43, %v42
  %v51 = vpack.c.b16 %v45, %v44
  %v52 = vpack.c.b16 %v47, %v46
  %v53 = vpack.c.b16 %v49, %v48
  %vm58 = vcmask 523264
  %v60 = vsel %vm58, %v33, 0
  %62 = vmatpush.bf16.msra.mxu0 0
  %63 = vmatpush.bf16.msra.mxu0 0
  %64 = vmatpush.bf16.msra.mxu0 0
  %65 = vmatpush.bf16.msra.mxu0 0
  %66 = vmatpush.bf16.msra.mxu0 %v53
  %67 = vmatpush.bf16.msra.mxu0 %v52
  %68 = vmatpush.bf16.msra.mxu0 %v51
  %69 = vmatpush.bf16.msra.mxu0 %v50
  %70 = vmatmul.bf16.gmra.mxu0 %v60
  %v71 = vpop.f32.mrf.mxu0
  %v72 = vadd.f32 %v27, %v71
  %v73 = vpop.f32.mrf.mxu0
  %v74 = vadd.f32 %v27, %v73
  %75 = vdwg.mxu0
  %v76 = vpack.c.bf16 %v72, %v72
  %v77 = vpack.c.bf16 %v74, %v74
  %vm78 = vcmask 257024
  %79 = vst.msk [vmem:[%s3] sm:$0xf] %vm78, %v76
  %80 = vst.msk [vmem:[%s3 + $0x4] sm:$0xf] %vm78, %v77
  // Predicated region
  $region14: #{sam2_image_encoder_forward.6} parent=0 // pred_check
    _
  $region15: #{sam2_image_encoder_forward.6} parent=0 // pred_check_branch
    %82 = sbr.rel (0) target = $region17
  $region16: #{sam2_image_encoder_forward.6} parent=0 // pred_region
    _
  $region17: #{sam2_image_encoder_forward.6} parent=0 // pred_fallthru
    _
  // Predicated region
  $region18: #{sam2_image_encoder_forward.6} parent=0 // pred_check
    _
  $region19: #{sam2_image_encoder_forward.6} parent=0 // pred_check_branch
    %84 = sbr.rel (0) target = $region21
  $region20: #{sam2_image_encoder_forward.6} parent=0 // pred_region
    _
  $region21: #{sam2_image_encoder_forward.6} parent=0 // pred_fallthru
    _

// kernel: sam2_image_encoder_forward.8
$region0: #{sam2_image_encoder_forward.8}
  #allocation0 [shape = 'u32[]', space=smem, size = 0x4, offset = 0x4, fixed_abs, tag = 'smem constant byte address 0x4 - core index']
  #allocation1 [shape = 'u32[72,128]{1,0:T(1,128)}', space=vmem, size = 0x9000, scoped, tag = 'internal scratch']
  %s0 = inlined_call_operand.vmem [shape: bf16[16,32], index: 0, kind: input, shape index: {}]
  %s1 = inlined_call_operand.vmem [shape: bf16[32,32], index: 1, kind: input, shape index: {}]
  %s2 = inlined_call_operand.vmem [shape: f32[1,32], index: 2, kind: input, shape index: {}]
  %s3 = inlined_call_operand.vmem [shape: f32[16,4], index: 3, kind: input, shape index: {}]
  %s4 = inlined_call_operand.vmem [shape: f32[4,32], index: 4, kind: input, shape index: {}]
  %s5 = inlined_call_operand.vmem [shape: bf16[32,8], index: 5, kind: input, shape index: {}]
  %s6 = inlined_call_operand.vmem [shape: f32[1,8], index: 6, kind: input, shape index: {}]
  %s7 = inlined_call_operand.vmem [shape: f32[16,32], index: 7, kind: output, shape index: {0}]
  %s8 = inlined_call_operand.hbm [shape: f32[16,8], index: 8, kind: output, shape index: {1}]
  %9 = xla_tuple %s7, %s8
  %s10 = sld [smem:[#allocation0]]
  $region46: #{sam2_image_encoder_forward.8} parent=0
    _
  %s12 = ssub.s32 1, %s10
  %s13 = scalar_select 0, %s12, %s10
  $region1: #{sam2_image_encoder_forward.8} parent=0
    #allocation2 [shape = 'u8[8192]{0}', space=vmem, size = 0x2000, scoped, tag = 'output window, operand 1, single buffered']
    #allocation3 [shape = 's32[1]{0}', space=sflag, size = 0x4, scoped, tag = 'scoped memory for sam2_image_encoder_forward.8']
    %14 = vsyncpa [#allocation3], 0
    // Predicated region
    $region2: #{sam2_image_encoder_forward.8} parent=1 // pred_check
      _
    $region3: #{sam2_image_encoder_forward.8} parent=1 // pred_check_branch
      %16 = sbr.rel (0) target = $region5
    $region4: #{sam2_image_encoder_forward.8} parent=1 // pred_region
      _
    $region5: #{sam2_image_encoder_forward.8} parent=1 // pred_fallthru
      _
    // Predicated region
    $region6: #{sam2_image_encoder_forward.8} parent=1 // pred_check
      _
    $region7: #{sam2_image_encoder_forward.8} parent=1 // pred_check_branch
      %18 = sbr.rel (0) target = $region9
    $region8: #{sam2_image_encoder_forward.8} parent=1 // pred_region
      _
    $region9: #{sam2_image_encoder_forward.8} parent=1 // pred_fallthru
      _
    // Predicated region
    $region10: #{sam2_image_encoder_forward.8} parent=1 // pred_check
      _
    $region11: #{sam2_image_encoder_forward.8} parent=1 // pred_check_branch
      %20 = sbr.rel (0) target = $region13
    $region12: #{sam2_image_encoder_forward.8} parent=1 // pred_region
      _
    $region13: #{sam2_image_encoder_forward.8} parent=1 // pred_fallthru
      _
    // Predicated region
    $region14: #{sam2_image_encoder_forward.8} parent=1 // pred_check
      _
    $region15: #{sam2_image_encoder_forward.8} parent=1 // pred_check_branch
      %22 = sbr.rel (0) target = $region17
    $region16: #{sam2_image_encoder_forward.8} parent=1 // pred_region
      _
    $region17: #{sam2_image_encoder_forward.8} parent=1 // pred_fallthru
      _
    // Predicated region
    $region18: #{sam2_image_encoder_forward.8} parent=1 // pred_check
      _
    $region19: #{sam2_image_encoder_forward.8} parent=1 // pred_check_branch
      %24 = sbr.rel (0) target = $region21
    $region20: #{sam2_image_encoder_forward.8} parent=1 // pred_region
      _
    $region21: #{sam2_image_encoder_forward.8} parent=1 // pred_fallthru
      _
    // Predicated region
    $region22: #{sam2_image_encoder_forward.8} parent=1 // pred_check
      _
    $region23: #{sam2_image_encoder_forward.8} parent=1 // pred_check_branch
      %26 = sbr.rel (0) target = $region25
    $region24: #{sam2_image_encoder_forward.8} parent=1 // pred_region
      _
    $region25: #{sam2_image_encoder_forward.8} parent=1 // pred_fallthru
      _
    // Predicated region
    $region26: #{sam2_image_encoder_forward.8} parent=1 // pred_check
      _
    $region27: #{sam2_image_encoder_forward.8} parent=1 // pred_check_branch
      %28 = sbr.rel (0) target = $region29
    $region28: #{sam2_image_encoder_forward.8} parent=1 // pred_region
      _
    $region29: #{sam2_image_encoder_forward.8} parent=1 // pred_fallthru
      _
    %v30 = vld [vmem:[%s0] sm:$0xf]
    %v31 = vld [vmem:[%s0 + $0x4] sm:$0xf]
    %v32 = vld [vmem:[%s1] sm:$0xf]
    %v33 = vld [vmem:[%s1 + $0x4] sm:$0xf]
    %v34 = vld [vmem:[%s1 + $0x8] sm:$0xf]
    %v35 = vld [vmem:[%s1 + $0xc] sm:$0xf]
    %v36 = vld [vmem:[%s2] sm:$0x1]
    %v38 = vperm.slane %v36, 0
    %v42 = vunpack.c.l.b16 %v30
    %v43 = vunpack.c.l.b16 %v31
    %v44 = vpack.c.b16 %v43, %v42
    %v49 = vunpack.c.l.b16 %v32
    %v50 = vunpack.c.l.b16 %v33
    %v51 = vunpack.c.l.b16 %v34
    %v52 = vunpack.c.l.b16 %v35
    %v53 = vpack.c.b16 %v50, %v49
    %v54 = vpack.c.b16 %v52, %v51
    %vm57 = vcmask 261120
    %v59 = vsel %vm57, %v44, 0
    %61 = vmatpush.bf16.msra.mxu0 0
    %62 = vmatpush.bf16.msra.mxu0 0
    %63 = vmatpush.bf16.msra.mxu0 0
    %64 = vmatpush.bf16.msra.mxu0 0
    %65 = vmatpush.bf16.msra.mxu0 0
    %66 = vmatpush.bf16.msra.mxu0 0
    %67 = vmatpush.bf16.msra.mxu0 %v54
    %68 = vmatpush.bf16.msra.mxu0 %v53
    %69 = vmatmul.bf16.gmra.mxu0 %v59
    %v70 = vpop.f32.mrf.mxu0
    %v71 = vadd.f32 %v38, %v70
    %v72 = vpop.f32.mrf.mxu0
    %v73 = vadd.f32 %v38, %v72
    %74 = vdwg.mxu0
    %v75 = vld [vmem:[%s3] sm:$0xff]
    %v76 = vld [vmem:[%s3 + $0x8] sm:$0xff]
    %v77 = vld [vmem:[%s4] sm:$0xf]
    %vm78 = vcmask 31744
    %v80 = vsel %vm78, %v75, 0
    %v83 = vsel %vm78, %v76, 0
    %vm85 = vcmask 1043456
    %v87 = vsel %vm85, %v77, 0
    %89 = vmatpush.msra.mxu0 0.0
    %90 = vmatpush.msra.mxu0 0.0
    %91 = vmatpush.msra.mxu0 0.0
    %92 = vmatpush.msra.mxu0 0.0
    %93 = vmatpush.msra.mxu0 0.0
    %94 = vmatpush.msra.mxu0 0.0
    %95 = vmatpush.msra.mxu0 0.0
    %96 = vmatpush.msra.mxu0 0.0
    %97 = vmatpush.msra.mxu0 0.0
    %98 = vmatpush.msra.mxu0 0.0
    %99 = vmatpush.msra.mxu0 0.0
    %100 = vmatpush.msra.mxu0 0.0
    %101 = vmatpush.msra.mxu0 0.0
    %102 = vmatpush.msra.mxu0 0.0
    %103 = vmatpush.msra.mxu0 0.0
    %104 = vmatpush.msra.mxu0 %v87
    %105 = vmatmul.f32.gmra.mxu0 %v80
    %v106 = vpop.f32.mrf.mxu0
    %v107 = vadd.f32 0.0, %v106
    %108 = vmatmul.f32.gmra.mxu0 %v83
    %v109 = vpop.f32.mrf.mxu0
    %v110 = vadd.f32 0.0, %v109
    %111 = vdwg.mxu0
    %v112 = vadd.f32 %v71, %v107
    %v113 = vadd.f32 %v73, %v110
    %v114 = vpack.c.bf16 %v113, %v112
    %v115 = vld [vmem:[%s5] sm:$0xf]
    %v116 = vld [vmem:[%s5 + $0x4] sm:$0xf]
    %v117 = vld [vmem:[%s5 + $0x8] sm:$0xf]
    %v118 = vld [vmem:[%s5 + $0xc] sm:$0xf]
    %v119 = vld [vmem:[%s6] sm:$0x1]
    %v121 = vperm.slane %v119, 0
    %v127 = vunpack.c.l.b16 %v115
    %v128 = vunpack.c.l.b16 %v116
    %v129 = vunpack.c.l.b16 %v117
    %v130 = vunpack.c.l.b16 %v118
    %v131 = vpack.c.b16 %v128, %v127
    %v132 = vpack.c.b16 %v130, %v129
    %v136 = vsel %vm57, %v114, 0
    %138 = vmatpush.bf16.msra.mxu0 0
    %139 = vmatpush.bf16.msra.mxu0 0
    %140 = vmatpush.bf16.msra.mxu0 0
    %141 = vmatpush.bf16.msra.mxu0 0
    %142 = vmatpush.bf16.msra.mxu0 0
    %143 = vmatpush.bf16.msra.mxu0 0
    %144 = vmatpush.bf16.msra.mxu0 %v132
    %145 = vmatpush.bf16.msra.mxu0 %v131
    %146 = vmatmul.bf16.gmra.mxu0 %v136
    %v147 = vpop.f32.mrf.mxu0
    %v148 = vadd.f32 %v121, %v147
    %v149 = vpop.f32.mrf.mxu0
    %v150 = vadd.f32 %v121, %v149
    %151 = vdwg.mxu0
    %152 = vst.msk [vmem:[%s7] sm:$0xff] %vm57, %v112
    %153 = vst.msk [vmem:[%s7 + $0x8] sm:$0xff] %vm57, %v113
    %vm154 = vcmask 64512
    %155 = vst.msk [vmem:[#allocation2] sm:$0xff] %vm154, %v148
    %156 = vst.msk [vmem:[#allocation2 + $0x8] sm:$0xff] %vm154, %v150
    // Predicated region
    $region30: #{sam2_image_encoder_forward.8} parent=1 // pred_check
      _
    $region31: #{sam2_image_encoder_forward.8} parent=1 // pred_check_branch
      %158 = sbr.rel (0) target = $region33
    $region32: #{sam2_image_encoder_forward.8} parent=1 // pred_region
      _
    $region33: #{sam2_image_encoder_forward.8} parent=1 // pred_fallthru
      _
    // Predicated region
    $region34: #{sam2_image_encoder_forward.8} parent=1 // pred_check
      _
    $region35: #{sam2_image_encoder_forward.8} parent=1 // pred_check_branch
      %160 = sbr.rel (0) target = $region37
    $region36: #{sam2_image_encoder_forward.8} parent=1 // pred_region
      %162 = vsyncadd [#allocation3], 0
      %s163 = sshll.u32 [#allocation2], 4
      %s164 = int_to_ptr.vmem [resolvable:$true] %s163
      %s165 = sshll.u32 %s8, 4
      %s166 = int_to_ptr.hbm [resolvable:$true] %s165
      %171 = dma.vmem_to_hbm [thread:$0]  %s164, 256, %s166, [#allocation3], 128, 128, 8
    $region37: #{sam2_image_encoder_forward.8} parent=1 // pred_fallthru
      _
    // Predicated region
    $region38: #{sam2_image_encoder_forward.8} parent=1 // pred_check
      _
    $region39: #{sam2_image_encoder_forward.8} parent=1 // pred_check_branch
      %173 = sbr.rel (0) target = $region41
    $region40: #{sam2_image_encoder_forward.8} parent=1 // pred_region
      _
    $region41: #{sam2_image_encoder_forward.8} parent=1 // pred_fallthru
      _
    // Predicated region
    $region42: #{sam2_image_encoder_forward.8} parent=1 // pred_check
      _
    $region43: #{sam2_image_encoder_forward.8} parent=1 // pred_check_branch
      %175 = sbr.rel (0) target = $region45
    $region44: #{sam2_image_encoder_forward.8} parent=1 // pred_region
      %177 = dma.done [#allocation3], 256
    $region45: #{sam2_image_encoder_forward.8} parent=1 // pred_fallthru
      _
    %178 = vsyncpa [#allocation3], 1

// kernel: sam2_image_encoder_forward.7
$region0: #{sam2_image_encoder_forward.7}
  #allocation0 [shape = 'u32[]', space=smem, size = 0x4, offset = 0x4, fixed_abs, tag = 'smem constant byte address 0x4 - core index']
  #allocation1 [shape = 'u32[72,128]{1,0:T(1,128)}', space=vmem, size = 0x9000, scoped, tag = 'internal scratch']
  %s0 = inlined_call_operand.vmem [shape: bf16[4,128], index: 0, kind: input, shape index: {}]
  %s1 = inlined_call_operand.vmem [shape: bf16[128,64], index: 1, kind: input, shape index: {}]
  %s2 = inlined_call_operand.vmem [shape: f32[1,64], index: 2, kind: input, shape index: {}]
  %s3 = inlined_call_operand.vmem [shape: bf16[64,32], index: 3, kind: input, shape index: {}]
  %s4 = inlined_call_operand.vmem [shape: f32[1,32], index: 4, kind: input, shape index: {}]
  %s5 = inlined_call_operand.vmem [shape: f32[1,32], index: 5, kind: input, shape index: {}]
  %s6 = inlined_call_operand.vmem [shape: f32[4,32], index: 6, kind: output, shape index: {0}]
  %s7 = inlined_call_operand.hbm [shape: f32[4,32], index: 7, kind: output, shape index: {1}]
  %8 = xla_tuple %s6, %s7
  %s9 = sld [smem:[#allocation0]]
  $region42: #{sam2_image_encoder_forward.7} parent=0
    _
  %s11 = ssub.s32 1, %s9
  %s12 = scalar_select 0, %s11, %s9
  $region1: #{sam2_image_encoder_forward.7} parent=0
    #allocation2 [shape = 'u8[2048]{0}', space=vmem, size = 0x800, scoped, tag = 'output window, operand 1, single buffered']
    #allocation3 [shape = 's32[1]{0}', space=sflag, size = 0x4, scoped, tag = 'scoped memory for sam2_image_encoder_forward.7']
    %13 = vsyncpa [#allocation3], 0
    // Predicated region
    $region2: #{sam2_image_encoder_forward.7} parent=1 // pred_check
      _
    $region3: #{sam2_image_encoder_forward.7} parent=1 // pred_check_branch
      %15 = sbr.rel (0) target = $region5
    $region4: #{sam2_image_encoder_forward.7} parent=1 // pred_region
      _
    $region5: #{sam2_image_encoder_forward.7} parent=1 // pred_fallthru
      _
    // Predicated region
    $region6: #{sam2_image_encoder_forward.7} parent=1 // pred_check
      _
    $region7: #{sam2_image_encoder_forward.7} parent=1 // pred_check_branch
      %17 = sbr.rel (0) target = $region9
    $region8: #{sam2_image_encoder_forward.7} parent=1 // pred_region
      _
    $region9: #{sam2_image_encoder_forward.7} parent=1 // pred_fallthru
      _
    // Predicated region
    $region10: #{sam2_image_encoder_forward.7} parent=1 // pred_check
      _
    $region11: #{sam2_image_encoder_forward.7} parent=1 // pred_check_branch
      %19 = sbr.rel (0) target = $region13
    $region12: #{sam2_image_encoder_forward.7} parent=1 // pred_region
      _
    $region13: #{sam2_image_encoder_forward.7} parent=1 // pred_fallthru
      _
    // Predicated region
    $region14: #{sam2_image_encoder_forward.7} parent=1 // pred_check
      _
    $region15: #{sam2_image_encoder_forward.7} parent=1 // pred_check_branch
      %21 = sbr.rel (0) target = $region17
    $region16: #{sam2_image_encoder_forward.7} parent=1 // pred_region
      _
    $region17: #{sam2_image_encoder_forward.7} parent=1 // pred_fallthru
      _
    // Predicated region
    $region18: #{sam2_image_encoder_forward.7} parent=1 // pred_check
      _
    $region19: #{sam2_image_encoder_forward.7} parent=1 // pred_check_branch
      %23 = sbr.rel (0) target = $region21
    $region20: #{sam2_image_encoder_forward.7} parent=1 // pred_region
      _
    $region21: #{sam2_image_encoder_forward.7} parent=1 // pred_fallthru
      _
    // Predicated region
    $region22: #{sam2_image_encoder_forward.7} parent=1 // pred_check
      _
    $region23: #{sam2_image_encoder_forward.7} parent=1 // pred_check_branch
      %25 = sbr.rel (0) target = $region25
    $region24: #{sam2_image_encoder_forward.7} parent=1 // pred_region
      _
    $region25: #{sam2_image_encoder_forward.7} parent=1 // pred_fallthru
      _
    %v27 = vld [vmem:[%s0] sm:$0x3]
    %v28 = vld [vmem:[%s1] sm:$0xf]
    %v29 = vld [vmem:[%s1 + $0x4] sm:$0xf]
    %v30 = vld [vmem:[%s1 + $0x8] sm:$0xf]
    %v31 = vld [vmem:[%s1 + $0xc] sm:$0xf]
    %v32 = vld [vmem:[%s1 + $0x10] sm:$0xf]
    %v33 = vld [vmem:[%s1 + $0x14] sm:$0xf]
    %v34 = vld [vmem:[%s1 + $0x18] sm:$0xf]
    %v35 = vld [vmem:[%s1 + $0x1c] sm:$0xf]
    %v36 = vld [vmem:[%s1 + $0x20] sm:$0xf]
    %v37 = vld [vmem:[%s1 + $0x24] sm:$0xf]
    %v38 = vld [vmem:[%s1 + $0x28] sm:$0xf]
    %v39 = vld [vmem:[%s1 + $0x2c] sm:$0xf]
    %v40 = vld [vmem:[%s1 + $0x30] sm:$0xf]
    %v41 = vld [vmem:[%s1 + $0x34] sm:$0xf]
    %v42 = vld [vmem:[%s1 + $0x38] sm:$0xf]
    %v43 = vld [vmem:[%s1 + $0x3c] sm:$0xf]
    %v44 = vld [vmem:[%s2] sm:$0x1]
    %v46 = vperm.slane %v44, 0
    %v64 = vunpack.c.l.b16 %v28
    %v65 = vunpack.c.l.b16 %v29
    %v66 = vunpack.c.l.b16 %v30
    %v67 = vunpack.c.l.b16 %v31
    %v68 = vunpack.c.l.b16 %v32
    %v69 = vunpack.c.l.b16 %v33
    %v70 = vunpack.c.l.b16 %v34
    %v71 = vunpack.c.l.b16 %v35
    %v72 = vunpack.c.l.b16 %v36
    %v73 = vunpack.c.l.b16 %v37
    %v74 = vunpack.c.l.b16 %v38
    %v75 = vunpack.c.l.b16 %v39
    %v76 = vunpack.c.l.b16 %v40
    %v77 = vunpack.c.l.b16 %v41
    %v78 = vunpack.c.l.b16 %v42
    %v79 = vunpack.c.l.b16 %v43
    %v80 = vpack.c.b16 %v65, %v64
    %v81 = vpack.c.b16 %v67, %v66
    %v82 = vpack.c.b16 %v69, %v68
    %v83 = vpack.c.b16 %v71, %v70
    %v84 = vpack.c.b16 %v73, %v72
    %v85 = vpack.c.b16 %v75, %v74
    %v86 = vpack.c.b16 %v77, %v76
    %v87 = vpack.c.b16 %v79, %v78
    %96 = vmatpush.bf16.msra.mxu0 %v87
    %97 = vmatpush.bf16.msra.mxu0 %v86
    %98 = vmatpush.bf16.msra.mxu0 %v85
    %99 = vmatpush.bf16.msra.mxu0 %v84
    %100 = vmatpush.bf16.msra.mxu0 %v83
    %101 = vmatpush.bf16.msra.mxu0 %v82
    %102 = vmatpush.bf16.msra.mxu0 %v81
    %103 = vmatpush.bf16.msra.mxu0 %v80
    %104 = vmatmul.bf16.gmra.mxu0 %v27
    %v105 = vpop.f32.mrf.mxu0
    %v106 = vadd.f32 %v46, %v105
    %v107 = vpop.f32.mrf.mxu0
    %108 = vdwg.mxu0
    %v109 = vpack.c.bf16 %v106, %v106
    %v110 = vld [vmem:[%s3] sm:$0xf]
    %v111 = vld [vmem:[%s3 + $0x4] sm:$0xf]
    %v112 = vld [vmem:[%s3 + $0x8] sm:$0xf]
    %v113 = vld [vmem:[%s3 + $0xc] sm:$0xf]
    %v114 = vld [vmem:[%s3 + $0x10] sm:$0xf]
    %v115 = vld [vmem:[%s3 + $0x14] sm:$0xf]
    %v116 = vld [vmem:[%s3 + $0x18] sm:$0xf]
    %v117 = vld [vmem:[%s3 + $0x1c] sm:$0xf]
    %v118 = vld [vmem:[%s4] sm:$0x1]
    %v120 = vperm.slane %v118, 0
    %v130 = vunpack.c.l.b16 %v110
    %v131 = vunpack.c.l.b16 %v111
    %v132 = vunpack.c.l.b16 %v112
    %v133 = vunpack.c.l.b16 %v113
    %v134 = vunpack.c.l.b16 %v114
    %v135 = vunpack.c.l.b16 %v115
    %v136 = vunpack.c.l.b16 %v116
    %v137 = vunpack.c.l.b16 %v117
    %v138 = vpack.c.b16 %v131, %v130
    %v139 = vpack.c.b16 %v133, %v132
    %v140 = vpack.c.b16 %v135, %v134
    %v141 = vpack.c.b16 %v137, %v136
    %vm146 = vcmask 523264
    %v148 = vsel %vm146, %v109, 0
    %150 = vmatpush.bf16.msra.mxu0 0
    %151 = vmatpush.bf16.msra.mxu0 0
    %152 = vmatpush.bf16.msra.mxu0 0
    %153 = vmatpush.bf16.msra.mxu0 0
    %154 = vmatpush.bf16.msra.mxu0 %v141
    %155 = vmatpush.bf16.msra.mxu0 %v140
    %156 = vmatpush.bf16.msra.mxu0 %v139
    %157 = vmatpush.bf16.msra.mxu0 %v138
    %158 = vmatmul.bf16.gmra.mxu0 %v148
    %v159 = vpop.f32.mrf.mxu0
    %v160 = vadd.f32 %v120, %v159
    %v161 = vpop.f32.mrf.mxu0
    %162 = vdwg.mxu0
    %vm163 = vcmask 257024
    %164 = vst.msk [vmem:[%s6] sm:$0xf] %vm163, %v160
    %v165 = vld [vmem:[%s5] sm:$0x1]
    %v167 = vperm.slane %v165, 0
    %v169 = vadd.f32 %v160, %v167
    %170 = vst.msk [vmem:[#allocation2] sm:$0xf] %vm163, %v169
    // Predicated region
    $region26: #{sam2_image_encoder_forward.7} parent=1 // pred_check
      _
    $region27: #{sam2_image_encoder_forward.7} parent=1 // pred_check_branch
      %172 = sbr.rel (0) target = $region29
    $region28: #{sam2_image_encoder_forward.7} parent=1 // pred_region
      _
    $region29: #{sam2_image_encoder_forward.7} parent=1 // pred_fallthru
      _
    // Predicated region
    $region30: #{sam2_image_encoder_forward.7} parent=1 // pred_check
      _
    $region31: #{sam2_image_encoder_forward.7} parent=1 // pred_check_branch
      %174 = sbr.rel (0) target = $region33
    $region32: #{sam2_image_encoder_forward.7} parent=1 // pred_region
      %176 = vsyncadd [#allocation3], 0
      %s178 = sshll.u32 [#allocation2], 4
      %s179 = int_to_ptr.vmem [resolvable:$true] %s178
      %s180 = sshll.u32 %s7, 4
      %s181 = int_to_ptr.hbm [resolvable:$true] %s180
      %183 = dma.vmem_to_hbm [thread:$0]  %s179, 64, %s181, [#allocation3]
    $region33: #{sam2_image_encoder_forward.7} parent=1 // pred_fallthru
      _
    // Predicated region
    $region34: #{sam2_image_encoder_forward.7} parent=1 // pred_check
      _
    $region35: #{sam2_image_encoder_forward.7} parent=1 // pred_check_branch
      %185 = sbr.rel (0) target = $region37
    $region36: #{sam2_image_encoder_forward.7} parent=1 // pred_region
      _
    $region37: #{sam2_image_encoder_forward.7} parent=1 // pred_fallthru
      _
    // Predicated region
    $region38: #{sam2_image_encoder_forward.7} parent=1 // pred_check
      _
    $region39: #{sam2_image_encoder_forward.7} parent=1 // pred_check_branch
      %187 = sbr.rel (0) target = $region41
    $region40: #{sam2_image_encoder_forward.7} parent=1 // pred_region
      %189 = dma.done [#allocation3], 64
    $region41: #{sam2_image_encoder_forward.7} parent=1 // pred_fallthru
      _
    %190 = vsyncpa [#allocation3], 1

// kernel: sam2_image_encoder_forward.9
$region0: #{sam2_image_encoder_forward.9}
  #allocation0 [shape = 'u32[]', space=smem, size = 0x4, offset = 0x4, fixed_abs, tag = 'smem constant byte address 0x4 - core index']
  #allocation1 [shape = 'u32[72,128]{1,0:T(1,128)}', space=vmem, size = 0x9000, scoped, tag = 'internal scratch']
  %s0 = inlined_call_operand.vmem [shape: bf16[64,16], index: 0, kind: input, shape index: {}]
  %s1 = inlined_call_operand.vmem [shape: bf16[16,32], index: 1, kind: input, shape index: {}]
  %s2 = inlined_call_operand.vmem [shape: f32[1,32], index: 2, kind: input, shape index: {}]
  %s3 = inlined_call_operand.vmem [shape: f32[32,8], index: 3, kind: input, shape index: {}]
  %s4 = inlined_call_operand.vmem [shape: f32[16,32], index: 4, kind: input, shape index: {}]
  %s5 = inlined_call_operand.vmem [shape: bf16[32,4], index: 5, kind: input, shape index: {}]
  %s6 = inlined_call_operand.vmem [shape: f32[1,4], index: 6, kind: input, shape index: {}]
  %s7 = inlined_call_operand.vmem [shape: f32[64,4], index: 7, kind: output, shape index: {}]
  %s8 = sld [smem:[#allocation0]]
  $region61: #{sam2_image_encoder_forward.9} parent=0
    _
  %s10 = ssub.s32 1, %s8
  %s11 = scalar_select 0, %s10, %s8
  loop: start=0, step=1, limit=4
  $region2: #{sam2_image_encoder_forward.9} parent=0 // loop_pre_header
    _
  $region3: #{sam2_image_encoder_forward.9} parent=0 // loop_header
    %s13 = sphi 0, %s17
    %p14 = scmp.ge.s32.totalorder %s13, 4
    %s23 = sphi 0, %s25
    %s26 = sphi 0, %s23
    %s27 = sphi 0, %s26
    %s43 = sphi 0, %s27
    %s47 = sphi 0, %s47
    %s49 = sphi 0, %s47
    %s50 = sphi 0, %s49
    %s64 = sphi 0, %s50
    %s68 = sphi 0, %s68
    %s70 = sphi 0, %s68
    %s71 = sphi 0, %s70
    %s85 = sphi 0, %s71
    %s89 = sphi 0, %s89
    %s91 = sphi 0, %s89
    %s92 = sphi 0, %s91
    %s106 = sphi 0, %s92
    %s112 = sphi 0, %s114
    %s115 = sphi 0, %s112
    %s116 = sphi 0, %s115
    %s132 = sphi 0, %s116
    %s136 = sphi 0, %s136
    %s138 = sphi 0, %s136
    %s139 = sphi 0, %s138
    %s153 = sphi 0, %s139
    %s157 = sphi 0, %s157
    %s159 = sphi 0, %s157
    %s160 = sphi 0, %s159
    %s174 = sphi 0, %s160
    %s180 = sphi 0, %s182
    %s183 = sphi 0, %s180
    %s184 = sphi 0, %s183
    %s200 = sphi 0, %s184
  $region4: #{sam2_image_encoder_forward.9} parent=0 // loop_header_branch
    %16 = sbr.rel (%p14) target = $region8
  $region5: #{sam2_image_encoder_forward.9} parent=0 // loop_body
    %s18 = ssub.s32 %s13, 1
    %s19 = ssub.s32 %s13, 2
    %s20 = sadd.s32 %s13, 1
    %s21 = ssub.s32 %s13, %s20
    %p22 = scmp.eq.s32.totalorder %s21, 0
    %s24 = sadd.s32 %s23, 1
    %s25 = scalar_select %p22, %s23, %s24
    %p28 = pneg %p22
    %p29 = scmp.eq.s32.totalorder %s13, 1
    %p30 = por %p28, %p29
    %p31 = scmp.ne.s32.totalorder %s23, %s26
    %p32 = scmp.eq.s32.totalorder %s13, 0
    %p33 = por %p31, %p32
    %p34 = scmp.ne.s32.totalorder %s23, %s26
    %p35 = scmp.eq.s32.totalorder %s18, 1
    %p36 = por %p34, %p35
    %p37 = scmp.ne.s32.totalorder %s26, %s27
    %p38 = scmp.eq.s32.totalorder %s18, 0
    %p39 = por %p37, %p38
    %p40 = scmp.ne.s32.totalorder %s26, %s27
    %p41 = scmp.eq.s32.totalorder %s19, 1
    %p42 = por %p40, %p41
    %p44 = scmp.ne.s32.totalorder %s27, %s43
    %p45 = scmp.eq.s32.totalorder %s19, 0
    %p46 = por %p44, %p45
    %s48 = sadd.s32 %s47, 1
    %p51 = scmp.eq.s32.totalorder %s13, 1
    %p52 = scmp.ne.s32.totalorder %s47, %s49
    %p53 = scmp.eq.s32.totalorder %s13, 0
    %p54 = por %p52, %p53
    %p55 = scmp.ne.s32.totalorder %s47, %s49
    %p56 = scmp.eq.s32.totalorder %s18, 1
    %p57 = por %p55, %p56
    %p58 = scmp.ne.s32.totalorder %s49, %s50
    %p59 = scmp.eq.s32.totalorder %s18, 0
    %p60 = por %p58, %p59
    %p61 = scmp.ne.s32.totalorder %s49, %s50
    %p62 = scmp.eq.s32.totalorder %s19, 1
    %p63 = por %p61, %p62
    %p65 = scmp.ne.s32.totalorder %s50, %s64
    %p66 = scmp.eq.s32.totalorder %s19, 0
    %p67 = por %p65, %p66
    %s69 = sadd.s32 %s68, 1
    %p72 = scmp.eq.s32.totalorder %s13, 1
    %p73 = scmp.ne.s32.totalorder %s68, %s70
    %p74 = scmp.eq.s32.totalorder %s13, 0
    %p75 = por %p73, %p74
    %p76 = scmp.ne.s32.totalorder %s68, %s70
    %p77 = scmp.eq.s32.totalorder %s18, 1
    %p78 = por %p76, %p77
    %p79 = scmp.ne.s32.totalorder %s70, %s71
    %p80 = scmp.eq.s32.totalorder %s18, 0
    %p81 = por %p79, %p80
    %p82 = scmp.ne.s32.totalorder %s70, %s71
    %p83 = scmp.eq.s32.totalorder %s19, 1
    %p84 = por %p82, %p83
    %p86 = scmp.ne.s32.totalorder %s71, %s85
    %p87 = scmp.eq.s32.totalorder %s19, 0
    %p88 = por %p86, %p87
    %s90 = sadd.s32 %s89, 1
    %p93 = scmp.eq.s32.totalorder %s13, 1
    %p94 = scmp.ne.s32.totalorder %s89, %s91
    %p95 = scmp.eq.s32.totalorder %s13, 0
    %p96 = por %p94, %p95
    %p97 = scmp.ne.s32.totalorder %s89, %s91
    %p98 = scmp.eq.s32.totalorder %s18, 1
    %p99 = por %p97, %p98
    %p100 = scmp.ne.s32.totalorder %s91, %s92
    %p101 = scmp.eq.s32.totalorder %s18, 0
    %p102 = por %p100, %p101
    %p103 = scmp.ne.s32.totalorder %s91, %s92
    %p104 = scmp.eq.s32.totalorder %s19, 1
    %p105 = por %p103, %p104
    %p107 = scmp.ne.s32.totalorder %s92, %s106
    %p108 = scmp.eq.s32.totalorder %s19, 0
    %p109 = por %p107, %p108
    %s110 = ssub.s32 %s13, %s20
    %p111 = scmp.eq.s32.totalorder %s110, 0
    %s113 = sadd.s32 %s112, 1
    %s114 = scalar_select %p111, %s112, %s113
    %p117 = pneg %p111
    %p118 = scmp.eq.s32.totalorder %s13, 1
    %p119 = por %p117, %p118
    %p120 = scmp.ne.s32.totalorder %s112, %s115
    %p121 = scmp.eq.s32.totalorder %s13, 0
    %p122 = por %p120, %p121
    %p123 = scmp.ne.s32.totalorder %s112, %s115
    %p124 = scmp.eq.s32.totalorder %s18, 1
    %p125 = por %p123, %p124
    %p126 = scmp.ne.s32.totalorder %s115, %s116
    %p127 = scmp.eq.s32.totalorder %s18, 0
    %p128 = por %p126, %p127
    %p129 = scmp.ne.s32.totalorder %s115, %s116
    %p130 = scmp.eq.s32.totalorder %s19, 1
    %p131 = por %p129, %p130
    %p133 = scmp.ne.s32.totalorder %s116, %s132
    %p134 = scmp.eq.s32.totalorder %s19, 0
    %p135 = por %p133, %p134
    %s137 = sadd.s32 %s136, 1
    %p140 = scmp.eq.s32.totalorder %s13, 1
    %p141 = scmp.ne.s32.totalorder %s136, %s138
    %p142 = scmp.eq.s32.totalorder %s13, 0
    %p143 = por %p141, %p142
    %p144 = scmp.ne.s32.totalorder %s136, %s138
    %p145 = scmp.eq.s32.totalorder %s18, 1
    %p146 = por %p144, %p145
    %p147 = scmp.ne.s32.totalorder %s138, %s139
    %p148 = scmp.eq.s32.totalorder %s18, 0
    %p149 = por %p147, %p148
    %p150 = scmp.ne.s32.totalorder %s138, %s139
    %p151 = scmp.eq.s32.totalorder %s19, 1
    %p152 = por %p150, %p151
    %p154 = scmp.ne.s32.totalorder %s139, %s153
    %p155 = scmp.eq.s32.totalorder %s19, 0
    %p156 = por %p154, %p155
    %s158 = sadd.s32 %s157, 1
    %p161 = scmp.eq.s32.totalorder %s13, 1
    %p162 = scmp.ne.s32.totalorder %s157, %s159
    %p163 = scmp.eq.s32.totalorder %s13, 0
    %p164 = por %p162, %p163
    %p165 = scmp.ne.s32.totalorder %s157, %s159
    %p166 = scmp.eq.s32.totalorder %s18, 1
    %p167 = por %p165, %p166
    %p168 = scmp.ne.s32.totalorder %s159, %s160
    %p169 = scmp.eq.s32.totalorder %s18, 0
    %p170 = por %p168, %p169
    %p171 = scmp.ne.s32.totalorder %s159, %s160
    %p172 = scmp.eq.s32.totalorder %s19, 1
    %p173 = por %p171, %p172
    %p175 = scmp.ne.s32.totalorder %s160, %s174
    %p176 = scmp.eq.s32.totalorder %s19, 0
    %p177 = por %p175, %p176
    %s178 = ssub.s32 %s13, %s20
    %p179 = scmp.eq.s32.totalorder %s178, 0
    %s181 = sadd.s32 %s180, 1
    %s182 = scalar_select %p179, %s180, %s181
    %p185 = pneg %p179
    %p186 = scmp.eq.s32.totalorder %s13, 1
    %p187 = por %p185, %p186
    %p188 = scmp.ne.s32.totalorder %s180, %s183
    %p189 = scmp.eq.s32.totalorder %s13, 0
    %p190 = por %p188, %p189
    %p191 = scmp.ne.s32.totalorder %s180, %s183
    %p192 = scmp.eq.s32.totalorder %s18, 1
    %p193 = por %p191, %p192
    %p194 = scmp.ne.s32.totalorder %s183, %s184
    %p195 = scmp.eq.s32.totalorder %s18, 0
    %p196 = por %p194, %p195
    %p197 = scmp.ne.s32.totalorder %s183, %s184
    %p198 = scmp.eq.s32.totalorder %s19, 1
    %p199 = por %p197, %p198
    %p201 = scmp.ne.s32.totalorder %s184, %s200
    %p202 = scmp.eq.s32.totalorder %s19, 0
    %p203 = por %p201, %p202
    %p204 = scmp.le.s32.totalorder 1, %s13
    %p205 = scmp.lt.s32.totalorder %s13, 3
    %p206 = pnand %p204, %p205
    %p207 = pneg %p206
    // Predicated region
    $region9: #{sam2_image_encoder_forward.9} parent=5 // pred_check
      _
    $region10: #{sam2_image_encoder_forward.9} parent=5 // pred_check_branch
      %209 = sbr.rel (%p206) target = $region12
    $region11: #{sam2_image_encoder_forward.9} parent=5 // pred_region
      %s210 = ssub.s32 %s13, 1
      // Predicated region
      $region13: #{sam2_image_encoder_forward.9} parent=11 // pred_check
        %p211 = pneg %p60
      $region14: #{sam2_image_encoder_forward.9} parent=11 // pred_check_branch
        %213 = sbr.rel (%p211) target = $region16
      $region15: #{sam2_image_encoder_forward.9} parent=11 // pred_region
        _
      $region16: #{sam2_image_encoder_forward.9} parent=11 // pred_fallthru
        _
      // Predicated region
      $region17: #{sam2_image_encoder_forward.9} parent=11 // pred_check
        %p214 = pneg %p81
      $region18: #{sam2_image_encoder_forward.9} parent=11 // pred_check_branch
        %216 = sbr.rel (%p214) target = $region20
      $region19: #{sam2_image_encoder_forward.9} parent=11 // pred_region
        _
      $region20: #{sam2_image_encoder_forward.9} parent=11 // pred_fallthru
        _
      // Predicated region
      $region21: #{sam2_image_encoder_forward.9} parent=11 // pred_check
        %p217 = pneg %p102
      $region22: #{sam2_image_encoder_forward.9} parent=11 // pred_check_branch
        %219 = sbr.rel (%p217) target = $region24
      $region23: #{sam2_image_encoder_forward.9} parent=11 // pred_region
        _
      $region24: #{sam2_image_encoder_forward.9} parent=11 // pred_fallthru
        _
      // Predicated region
      $region25: #{sam2_image_encoder_forward.9} parent=11 // pred_check
        %p220 = pneg %p149
      $region26: #{sam2_image_encoder_forward.9} parent=11 // pred_check_branch
        %222 = sbr.rel (%p220) target = $region28
      $region27: #{sam2_image_encoder_forward.9} parent=11 // pred_region
        _
      $region28: #{sam2_image_encoder_forward.9} parent=11 // pred_fallthru
        _
      // Predicated region
      $region29: #{sam2_image_encoder_forward.9} parent=11 // pred_check
        %p223 = pneg %p170
      $region30: #{sam2_image_encoder_forward.9} parent=11 // pred_check_branch
        %225 = sbr.rel (%p223) target = $region32
      $region31: #{sam2_image_encoder_forward.9} parent=11 // pred_region
        _
      $region32: #{sam2_image_encoder_forward.9} parent=11 // pred_fallthru
        _
    $region12: #{sam2_image_encoder_forward.9} parent=5 // pred_fallthru
      _
    %p226 = scmp.lt.s32.totalorder %s13, 2
    // Predicated region
    $region33: #{sam2_image_encoder_forward.9} parent=5 // pred_check
      %p227 = pneg %p226
    $region34: #{sam2_image_encoder_forward.9} parent=5 // pred_check_branch
      %229 = sbr.rel (%p227) target = $region36
    $region35: #{sam2_image_encoder_forward.9} parent=5 // pred_region
      // Predicated region
      $region37: #{sam2_image_encoder_forward.9} parent=35 // pred_check
        %p230 = pneg %p33
      $region38: #{sam2_image_encoder_forward.9} parent=35 // pred_check_branch
        %232 = sbr.rel (%p230) target = $region40
      $region39: #{sam2_image_encoder_forward.9} parent=35 // pred_region
        %s233 = smul.u32 4, %s13
        %p234 = scmp.lt.s32.totalorder %s233, 7
        %s235 = scalar_select %p234, %s233, 7
        %s236 = smul.addr %s235, 4
        %s237 = scalar_lea.vmem %s0, %s236
        %s238 = smul.u32 4, %s13
      $region40: #{sam2_image_encoder_forward.9} parent=35 // pred_fallthru
        _
      // Predicated region
      $region41: #{sam2_image_encoder_forward.9} parent=35 // pred_check
        %p239 = pneg %p122
      $region42: #{sam2_image_encoder_forward.9} parent=35 // pred_check_branch
        %241 = sbr.rel (%p239) target = $region44
      $region43: #{sam2_image_encoder_forward.9} parent=35 // pred_region
        %p242 = scmp.lt.s32.totalorder %s13, 1
        %s243 = scalar_select %p242, %s13, 1
        %s244 = smul.addr %s243, 8
        %s245 = scalar_lea.vmem %s4, %s244
      $region44: #{sam2_image_encoder_forward.9} parent=35 // pred_fallthru
        _
    $region36: #{sam2_image_encoder_forward.9} parent=5 // pred_fallthru
      _
    %p246 = scmp.le.s32.totalorder 1, %s13
    %p247 = scmp.lt.s32.totalorder %s13, 3
    %p248 = pnand %p246, %p247
    %p249 = pneg %p248
    // Predicated region
    $region45: #{sam2_image_encoder_forward.9} parent=5 // pred_check
      _
    $region46: #{sam2_image_encoder_forward.9} parent=5 // pred_check_branch
      %251 = sbr.rel (%p248) target = $region48
    $region47: #{sam2_image_encoder_forward.9} parent=5 // pred_region
      %s252 = ssub.s32 %s13, 1
      %s253 = smul.u32 4, %s18
      %p254 = scmp.lt.s32.totalorder %s253, 7
      %s255 = scalar_select %p254, %s253, 7
      %s256 = smul.addr %s255, 4
      %s257 = scalar_lea.vmem %s0, %s256
      %p258 = pneg %p39
      %p259 = pneg %p36
      %p260 = pneg %p60
      %p261 = pneg %p57
      %p262 = pneg %p81
      %p263 = pneg %p78
      %p264 = pneg %p102
      %p265 = pneg %p99
      %p266 = scmp.lt.s32.totalorder %s18, 1
      %s267 = scalar_select %p266, %s18, 1
      %s268 = smul.addr %s267, 8
      %s269 = scalar_lea.vmem %s4, %s268
      %p270 = pneg %p128
      %p271 = pneg %p125
      %p272 = pneg %p149
      %p273 = pneg %p146
      %p274 = pneg %p170
      %p275 = pneg %p167
      %p276 = pneg %p196
      %p277 = pneg %p193
      %s278 = smul.u32 4, %s18
      %p279 = scmp.lt.s32.totalorder %s278, 7
      %s280 = scalar_select %p279, %s278, 7
      %s281 = smul.addr %s280, 8
      %s282 = scalar_lea.vmem %s7, %s281
      %s283 = smul.u32 4, %s18
      %p284 = scmp.lt.s32.totalorder %s283, 7
      %s285 = scalar_select %p284, %s283, 7
      %s286 = smul.addr %s285, 4
      %s287 = scalar_lea.vmem %s0, %s286
      %s288 = smul.u32 4, %s18
      %p289 = scmp.lt.s32.totalorder %s18, 1
      %s290 = scalar_select %p289, %s18, 1
      %s291 = smul.addr %s290, 8
      %s292 = scalar_lea.vmem %s4, %s291
      %s293 = smul.u32 4, %s18
      %p294 = scmp.lt.s32.totalorder %s293, 7
      %s295 = scalar_select %p294, %s293, 7
      %s296 = smul.addr %s295, 8
      %s297 = scalar_lea.vmem %s7, %s296
      %s298 = smul.u32 4, %s18
      %v300 = vld [vmem:[%s287] sm:$0xf]
      %v301 = vld [vmem:[%s287 + $0x4] sm:$0xf]
      %v302 = vld [vmem:[%s287 + $0x8] sm:$0xf]
      %v303 = vld [vmem:[%s287 + $0xc] sm:$0xf]
      %v304 = vld [vmem:[%s1] sm:$0xf]
      %v305 = vld [vmem:[%s1 + $0x4] sm:$0xf]
      %v306 = vld [vmem:[%s2] sm:$0x1]
      %v308 = vperm.slane %v306, 0
      %v314 = vunpack.c.l.b16 %v300
      %v315 = vunpack.c.l.b16 %v301
      %v316 = vunpack.c.l.b16 %v302
      %v317 = vunpack.c.l.b16 %v303
      %v318 = vpack.c.b16 %v315, %v314
      %v319 = vpack.c.b16 %v317, %v316
      %v322 = vunpack.c.l.b16 %v304
      %v323 = vunpack.c.l.b16 %v305
      %v324 = vpack.c.b16 %v323, %v322
      %vm326 = vcmask 130048
      %v328 = vsel %vm326, %v318, 0
      %v331 = vsel %vm326, %v319, 0
      %333 = vmatpush.bf16.msra.mxu0 0
      %334 = vmatpush.bf16.msra.mxu0 0
      %335 = vmatpush.bf16.msra.mxu0 0
      %336 = vmatpush.bf16.msra.mxu0 0
      %337 = vmatpush.bf16.msra.mxu0 0
      %338 = vmatpush.bf16.msra.mxu0 0
      %339 = vmatpush.bf16.msra.mxu0 0
      %340 = vmatpush.bf16.msra.mxu0 %v324
      %341 = vmatmul.bf16.gmra.mxu0 %v328
      %v342 = vpop.f32.mrf.mxu0
      %v343 = vadd.f32 %v308, %v342
      %v344 = vpop.f32.mrf.mxu0
      %v345 = vadd.f32 %v308, %v344
      %346 = vmatmul.bf16.gmra.mxu0 %v331
      %v347 = vpop.f32.mrf.mxu0
      %v348 = vadd.f32 %v308, %v347
      %v349 = vpop.f32.mrf.mxu0
      %v350 = vadd.f32 %v308, %v349
      %351 = vdwg.mxu0
      %v352 = vld [vmem:[%s3] sm:$0xff]
      %v353 = vld [vmem:[%s3 + $0x8] sm:$0xff]
      %v354 = vld [vmem:[%s3 + $0x10] sm:$0xff]
      %v355 = vld [vmem:[%s3 + $0x18] sm:$0xff]
      %v356 = vld [vmem:[%s292] sm:$0xff]
      %vm357 = vcmask 64512
      %v359 = vsel %vm357, %v352, 0
      %v362 = vsel %vm357, %v353, 0
      %v365 = vsel %vm357, %v354, 0
      %v368 = vsel %vm357, %v355, 0
      %370 = vmatpush.msra.mxu0 0.0
      %371 = vmatpush.msra.mxu0 0.0
      %372 = vmatpush.msra.mxu0 0.0
      %373 = vmatpush.msra.mxu0 0.0
      %374 = vmatpush.msra.mxu0 0.0
      %375 = vmatpush.msra.mxu0 0.0
      %376 = vmatpush.msra.mxu0 0.0
      %377 = vmatpush.msra.mxu0 0.0
      %378 = vmatpush.msra.mxu0 0.0
      %379 = vmatpush.msra.mxu0 0.0
      %380 = vmatpush.msra.mxu0 0.0
      %381 = vmatpush.msra.mxu0 0.0
      %382 = vmatpush.msra.mxu0 0.0
      %383 = vmatpush.msra.mxu0 0.0
      %384 = vmatpush.msra.mxu0 0.0
      %385 = vmatpush.msra.mxu0 %v356
      %386 = vmatmul.f32.gmra.mxu0 %v359
      %v387 = vpop.f32.mrf.mxu0
      %v388 = vadd.f32 0.0, %v387
      %389 = vmatmul.f32.gmra.mxu0 %v362
      %v390 = vpop.f32.mrf.mxu0
      %v391 = vadd.f32 0.0, %v390
      %392 = vmatmul.f32.gmra.mxu0 %v365
      %v393 = vpop.f32.mrf.mxu0
      %v394 = vadd.f32 0.0, %v393
      %395 = vmatmul.f32.gmra.mxu0 %v368
      %v396 = vpop.f32.mrf.mxu0
      %v397 = vadd.f32 0.0, %v396
      %398 = vdwg.mxu0
      %v399 = vadd.f32 %v343, %v388
      %v400 = vadd.f32 %v345, %v391
      %v401 = vadd.f32 %v348, %v394
      %v402 = vadd.f32 %v350, %v397
      %v403 = vpack.c.bf16 %v400, %v399
      %v404 = vpack.c.bf16 %v402, %v401
      %v405 = vld [vmem:[%s5] sm:$0xf]
      %v406 = vld [vmem:[%s5 + $0x4] sm:$0xf]
      %v407 = vld [vmem:[%s5 + $0x8] sm:$0xf]
      %v408 = vld [vmem:[%s5 + $0xc] sm:$0xf]
      %v409 = vld [vmem:[%s6] sm:$0x1]
      %v411 = vperm.slane %v409, 0
      %v417 = vunpack.c.l.b16 %v405
      %v418 = vunpack.c.l.b16 %v406
      %v419 = vunpack.c.l.b16 %v407
      %v420 = vunpack.c.l.b16 %v408
      %v421 = vpack.c.b16 %v418, %v417
      %v422 = vpack.c.b16 %v420, %v419
      %vm425 = vcmask 261120
      %v427 = vsel %vm425, %v403, 0
      %v430 = vsel %vm425, %v404, 0
      %432 = vmatpush.bf16.msra.mxu0 0
      %433 = vmatpush.bf16.msra.mxu0 0
      %434 = vmatpush.bf16.msra.mxu0 0
      %435 = vmatpush.bf16.msra.mxu0 0
      %436 = vmatpush.bf16.msra.mxu0 0
      %437 = vmatpush.bf16.msra.mxu0 0
      %438 = vmatpush.bf16.msra.mxu0 %v422
      %439 = vmatpush.bf16.msra.mxu0 %v421
      %440 = vmatmul.bf16.gmra.mxu0 %v427
      %v441 = vpop.f32.mrf.mxu0
      %v442 = vadd.f32 %v411, %v441
      %v443 = vpop.f32.mrf.mxu0
      %v444 = vadd.f32 %v411, %v443
      %445 = vmatmul.bf16.gmra.mxu0 %v430
      %v446 = vpop.f32.mrf.mxu0
      %v447 = vadd.f32 %v411, %v446
      %v448 = vpop.f32.mrf.mxu0
      %v449 = vadd.f32 %v411, %v448
      %450 = vdwg.mxu0
      %vm451 = vcmask 31744
      %452 = vst.msk [vmem:[%s297] sm:$0xff] %vm451, %v442
      %453 = vst.msk [vmem:[%s297 + $0x8] sm:$0xff] %vm451, %v444
      %454 = vst.msk [vmem:[%s297 + $0x10] sm:$0xff] %vm451, %v447
      %455 = vst.msk [vmem:[%s297 + $0x18] sm:$0xff] %vm451, %v449
      %s456 = smul.u32 4, %s18
      %p457 = scmp.lt.s32.totalorder %s456, 7
      %s458 = scalar_select %p457, %s456, 7
      %s459 = smul.addr %s458, 8
      %s460 = scalar_lea.vmem %s7, %s459
      // Predicated region
      $region49: #{sam2_image_encoder_forward.9} parent=47 // pred_check
        %p461 = pneg %p193
      $region50: #{sam2_image_encoder_forward.9} parent=47 // pred_check_branch
        %463 = sbr.rel (%p461) target = $region52
      $region51: #{sam2_image_encoder_forward.9} parent=47 // pred_region
        %s464 = smul.u32 4, %s18
      $region52: #{sam2_image_encoder_forward.9} parent=47 // pred_fallthru
        _
    $region48: #{sam2_image_encoder_forward.9} parent=5 // pred_fallthru
      _
    %p465 = scmp.le.s32.totalorder 2, %s13
    // Predicated region
    $region53: #{sam2_image_encoder_forward.9} parent=5 // pred_check
      %p466 = pneg %p465
    $region54: #{sam2_image_encoder_forward.9} parent=5 // pred_check_branch
      %468 = sbr.rel (%p466) target = $region56
    $region55: #{sam2_image_encoder_forward.9} parent=5 // pred_region
      %s469 = ssub.s32 %s13, 2
      // Predicated region
      $region57: #{sam2_image_encoder_forward.9} parent=55 // pred_check
        %p470 = pneg %p199
      $region58: #{sam2_image_encoder_forward.9} parent=55 // pred_check_branch
        %472 = sbr.rel (%p470) target = $region60
      $region59: #{sam2_image_encoder_forward.9} parent=55 // pred_region
        %s473 = smul.u32 4, %s19
        %p474 = scmp.lt.s32.totalorder %s473, 7
        %s475 = scalar_select %p474, %s473, 7
        %s476 = smul.addr %s475, 8
        %s477 = scalar_lea.vmem %s7, %s476
      $region60: #{sam2_image_encoder_forward.9} parent=55 // pred_fallthru
        _
    $region56: #{sam2_image_encoder_forward.9} parent=5 // pred_fallthru
      _
  $region6: #{sam2_image_encoder_forward.9} parent=0 // loop_footer
    %s17 = sadd.s32 1, %s13
  $region7: #{sam2_image_encoder_forward.9} parent=0 // loop_footer_branch
    %12 = sbr.rel target = $region3
  $region8: #{sam2_image_encoder_forward.9} parent=0 // loop_exit
    _

</llo_original>
